<compile_context>
chip_gen: v7x
topology: tpu7x:2x2x1
jax: 0.10.0
libtpu: 0.0.40
codegen_flags: <defaults>
</compile_context>

<pallas_src>
import functools

import jax
import jax.numpy as jnp
import numpy as np
from jax import lax
from jax.experimental import pallas as pl
from jax.experimental.pallas import tpu as pltpu


_PALLAS_MIN_MAILBOX_BYTES = 512 * 1024   # below this, XLA fuses the block trivially
_SMEM_NBR_TABLE_LIMIT = 256 * 1024       # conservative cap for the scalar-prefetched table


def _round_up(x, m):
    return (x + m - 1) // m * m


# -----------------------------------------------------------------------------
# Pallas kernel: {row gather via DMA} -> {mean as scaled-W MXU dots} -> {bias, relu / concat}
# -----------------------------------------------------------------------------
def _node_update_kernel(
    nbr_ref,      # SMEM scalar-prefetch: (n_dst_p * fanout,) int32, row-major (dst row, slot)
    h_hbm,        # ANY/HBM:              (n_src, fin) source features
    w_ref,        # VMEM:                 (fin, fout_p) weights pre-scaled by 1/fanout
    b_ref,        # VMEM:                 (1, fout_p) f32 bias (zero in padded lanes)
    out_ref,      # VMEM:                 (tile_rows, out_w)
    gather_buf,   # VMEM scratch:         (fanout * tile_rows, fin); row j*tile_rows + r
    gather_sem,   # DMA semaphores:       (1,)
    *,
    tile_rows,
    fanout,
    fout_p,
    concat,
    activation,
):
    i = pl.program_id(0)
    base = i * (tile_rows * fanout)          # flat offset of this tile's first (row, slot) entry

    def row_copy(r, j, src_row):
        # One (1, fin) row: h_hbm[src_row] -> gather_buf[j * tile_rows + r].
        return pltpu.make_async_copy(
            h_hbm.at[pl.ds(src_row, 1)],
            gather_buf.at[pl.ds(j * tile_rows + r, 1)],
            gather_sem.at[0],
        )

    # ---- issue: one row DMA per (dst row, neighbor slot); fanout is small and static ------------
    def _issue(r, carry):
        for j in range(fanout):
            row_copy(r, j, nbr_ref[base + r * fanout + j]).start()
        return carry

    lax.fori_loop(0, tile_rows, _issue, 0)

    # ---- drain: matched waits (same (1, fin) descriptors / destinations as the issues) ----------
    def _drain(r, carry):
        for j in range(fanout):
            row_copy(r, j, 0).wait()
        return carry

    lax.fori_loop(0, tile_rows, _drain, 0)

    # ---- mean + linear: per-neighbor MXU dots with f32 accumulation -----------------------------
    acc = jnp.dot(gather_buf[pl.ds(0, tile_rows)], w_ref[...],
                  preferred_element_type=jnp.float32)
    for j in range(1, fanout):
        acc = acc + jnp.dot(gather_buf[pl.ds(j * tile_rows, tile_rows)], w_ref[...],
                            preferred_element_type=jnp.float32)
    y = acc + b_ref[...]

    # ---- activation / concat with lane-dense (multiple-of-128) sliced stores --------------------
    if concat:
        out_ref[:, :fout_p] = y.astype(out_ref.dtype)                       # torch.cat((h, relu(h)), 1)
        out_ref[:, fout_p:] = jnp.maximum(y, 0.0).astype(out_ref.dtype)
    elif activation:
        out_ref[...] = jnp.maximum(y, 0.0).astype(out_ref.dtype)
    else:
        out_ref[...] = y.astype(out_ref.dtype)


# -----------------------------------------------------------------------------
# Wrapper: one NodeUpdate layer, fused with the DGL mean-reduce of copy_src messages
# -----------------------------------------------------------------------------
def node_update(h_src, nbr, w, b, *, concat, activation, keep_padded_rows=False, use_pallas=None):
    """h_src: (n_src, fin) source features; nbr: (n_dst, fanout) int indices into h_src.
    w: (fin, fout); b: (fout,) or (1, fout).
    Returns (n_dst_or_padded, 2*fout) if concat else (..., fout)."""
    _, fin = h_src.shape
    n_dst, fanout = nbr.shape
    fout = w.shape[1]
    storage_dtype = h_src.dtype
    itemsize = h_src.dtype.itemsize

    # Small-problem fallback (review: tiny NodeFlow blocks are pure launch/DMA overhead).
    if use_pallas is None:
        use_pallas = n_dst * fanout * fin * itemsize >= _PALLAS_MIN_MAILBOX_BYTES

    fout_p = _round_up(fout, 128)            # lane-dense output stores
    out_w = 2 * fout_p if concat else fout_p

    # VMEM budget from the physical per-TensorCore VMEM (v7x: 64 MiB -> ~48 MiB budget).
    try:
        vmem_phys = int(pltpu.get_tpu_info().vmem_capacity_bytes)
    except Exception:
        vmem_phys = 64 << 20                 # conservative default = v7x
    vmem_budget = min(vmem_phys * 3 // 4, 112 << 20)

    # W/bias are grid-invariant but double-buffered by the pipeline; + 4 MiB headroom.
    fixed_bytes = 2 * fin * fout_p * itemsize + 2 * fout_p * 4 + (4 << 20)
    per_row_bytes = fanout * fin * itemsize + 2 * out_w * itemsize   # gather slab + 2x out block

    n8 = _round_up(n_dst, 8)
    tile = None
    for cand in (512, 256, 128, 64, 32, 16, 8):
        if cand <= n8 and fixed_bytes + cand * per_row_bytes <= vmem_budget:
            tile = cand
            break
    if tile is None:
        use_pallas = False                   # does not fit the VMEM budget even at 8 rows
    else:
        if _round_up(n8, tile) == tile and tile >= 16:
            tile //= 2                       # >= 2 grid programs -> both v7x TensorCores busy
        # Scalar-prefetched neighbor tables live in SMEM; bail out if they would not fit.
        # TODO(synk): stream the index table in chunks instead of falling back for huge blocks.
        if use_pallas and _round_up(n_dst, tile) * fanout * 4 > _SMEM_NBR_TABLE_LIMIT:
            use_pallas = False

    if not use_pallas:
        # Fused pure-XLA path (also the semantics reference): mean -> linear -> relu/concat.
        mb = jnp.take(h_src, nbr, axis=0).astype(jnp.float32)           # (n_dst, fanout, fin)
        y = jnp.mean(mb, axis=1) @ w.astype(jnp.float32) + jnp.asarray(b, jnp.float32).reshape(1, -1)
        if concat:
            y = jnp.concatenate([y, jax.nn.relu(y)], axis=-1)
        elif activation:
            y = jax.nn.relu(y)
        return y.astype(storage_dtype)

    n_dst_p = _round_up(n_dst, tile)
    grid = (n_dst_p // tile,)

    # Flattened, zero-padded neighbor table (index 0 is always a valid row -> no OOB DMA).
    nbr_flat = jnp.pad(nbr.astype(jnp.int32).reshape(-1), (0, (n_dst_p - n_dst) * fanout))

    # Fold the 1/fanout of the mean into W; zero-pad output lanes (zero cols / zero bias).
    w_p = jnp.pad(w.astype(jnp.float32) / float(fanout),
                  ((0, 0), (0, fout_p - fout))).astype(storage_dtype)
    b_p = jnp.pad(jnp.asarray(b, jnp.float32).reshape(1, -1), ((0, 0), (0, fout_p - fout)))

    vmem_need = fixed_bytes + tile * per_row_bytes
    vmem_limit = int(min(max(vmem_need, 16 << 20), vmem_budget))

    cost = pl.CostEstimate(
        flops=int(2 * n_dst_p * fanout * fin * fout_p),
        transcendentals=0,
        bytes_accessed=int(n_dst_p * fanout * (fin * itemsize + 4)
                           + fin * fout_p * itemsize + fout_p * 4
                           + n_dst_p * out_w * itemsize),
    )

    kernel = functools.partial(
        _node_update_kernel, tile_rows=tile, fanout=fanout, fout_p=fout_p,
        concat=concat, activation=activation,
    )

    out = pl.pallas_call(
        kernel,
        out_shape=jax.ShapeDtypeStruct((n_dst_p, out_w), storage_dtype),
        grid_spec=pltpu.PrefetchScalarGridSpec(
            num_scalar_prefetch=1,                                   # neighbor table -> SMEM
            grid=grid,
            in_specs=[
                pl.BlockSpec(memory_space=pl.ANY),                   # h_src stays in HBM
                pl.BlockSpec((fin, fout_p), lambda i, _nbr: (0, 0)),  # resident weights
                pl.BlockSpec((1, fout_p), lambda i, _nbr: (0, 0)),    # resident bias
            ],
            out_specs=pl.BlockSpec((tile, out_w), lambda i, _nbr: (i, 0)),
            scratch_shapes=[
                pltpu.VMEM((fanout * tile, fin), storage_dtype),     # in-kernel gather buffer
                pltpu.SemaphoreType.DMA((1,)),
            ],
        ),
        compiler_params=pltpu.CompilerParams(
            dimension_semantics=("parallel",),
            vmem_limit_bytes=vmem_limit,
        ),
        cost_estimate=cost,
    )(nbr_flat, h_src, w_p, b_p)

    # Post-kernel repack only when the logical width is not already lane-dense (fout % 128 != 0);
    # padded rows only contain bias values and are never reachable via neighbor indices.
    if concat:
        res = out if fout == fout_p else jnp.concatenate(
            [out[:, :fout], out[:, fout_p:fout_p + fout]], axis=-1)
    else:
        res = out if fout == fout_p else out[:, :fout]
    if not keep_padded_rows:
        res = res[:n_dst]
    return res


# -----------------------------------------------------------------------------
# GCNSampling-style forward over a synthetic NodeFlow (dropout=0, test=False)
# -----------------------------------------------------------------------------
def gcn_sampling_forward(features, layer_params, neighbors, *, force_pallas=None):
    """features: (N0, in_feats); layer_params: [(W[fin,fout], b, activation, concat), ...];
    neighbors[i]: (N_{i+1}, fanout) int32 indexing layer-i nodes."""
    # TODO(synk): dropout>0 and test-mode norm scaling (h * node.data['norm']) are not modeled.
    h = features
    n_layers = len(layer_params)
    for li, ((w, b, act, concat), nbr) in enumerate(zip(layer_params, neighbors)):
        h = node_update(h, nbr, w, b, concat=concat, activation=act,
                        keep_padded_rows=(li + 1 < n_layers),
                        use_pallas=force_pallas)
    return h.astype(jnp.float32)


# Pure-JAX reference for verification.
def gcn_sampling_reference(features, layer_params, neighbors):
    h = features.astype(jnp.float32)
    for (w, b, act, concat), nbr in zip(layer_params, neighbors):
        mb = jnp.take(h, nbr, axis=0)                                   # (n_dst, fanout, fin)
        y = jnp.mean(mb, axis=1) @ w.astype(jnp.float32) + jnp.asarray(b, jnp.float32).reshape(1, -1)
        if concat:
            h = jnp.concatenate([y, jax.nn.relu(y)], axis=-1)
        elif act:
            h = jax.nn.relu(y)
        else:
            h = y
    return h


def init_linear(key, fin, fout):
    """Deterministic nn.Linear-style init; returns W in [fin, fout] layout and b as (1, fout)."""
    kw, kb = jax.random.split(key)
    bound = 1.0 / np.sqrt(fin)
    w = jax.random.uniform(kw, (fout, fin), jnp.float32, -bound, bound)  # torch layout (out, in)
    b = jax.random.uniform(kb, (fout,), jnp.float32, -bound, bound)
    return w.T, b.reshape(1, fout)


if __name__ == "__main__":
    # Small model (consistent with GCNSampling.__init__); n_hidden=128 keeps intermediate layers
    # lane-dense so they exercise the "no post-kernel repack" path.
    in_feats, n_hidden, n_classes = 64, 128, 16
    fanout = 4
    layer_sizes = [512, 256, 128, 64]        # synthetic NodeFlow node counts per layer

    key = jax.random.PRNGKey(0)
    k_feat, k_l0, k_l1, k_l2, k_n0, k_n1, k_n2 = jax.random.split(key, 7)

    w0, b0 = init_linear(k_l0, in_feats, n_hidden)
    w1, b1 = init_linear(k_l1, n_hidden, n_hidden)
    w2, b2 = init_linear(k_l2, 2 * n_hidden, n_classes)
    layer_params = [
        (w0, b0, True, False),   # NodeUpdate(in_feats, n_hidden, relu)
        (w1, b1, True, True),    # NodeUpdate(n_hidden, n_hidden, relu, concat=True)  skip layer
        (w2, b2, False, False),  # NodeUpdate(2*n_hidden, n_classes)                  classifier
    ]

    features = jax.random.normal(k_feat, (layer_sizes[0], in_feats), jnp.float32)
    neighbors = [
        jax.random.randint(k_n0, (layer_sizes[1], fanout), 0, layer_sizes[0], jnp.int32),
        jax.random.randint(k_n1, (layer_sizes[2], fanout), 0, layer_sizes[1], jnp.int32),
        jax.random.randint(k_n2, (layer_sizes[3], fanout), 0, layer_sizes[2], jnp.int32),
    ]

    ref = gcn_sampling_reference(features, layer_params, neighbors)

    # Force the fused Pallas path (the auto heuristic routes blocks this small to XLA).
    out = gcn_sampling_forward(features, layer_params, neighbors, force_pallas=True)
    out = jax.block_until_ready(out)
    np.testing.assert_allclose(np.asarray(out), np.asarray(ref), rtol=1e-5, atol=1e-5)
    assert out.shape == (layer_sizes[-1], n_classes)

    # Auto mode: demo-scale blocks take the pure-XLA fallback (review: skip kernel overhead on
    # tiny NodeFlow blocks); numerics must agree as well.
    out_auto = jax.block_until_ready(gcn_sampling_forward(features, layer_params, neighbors))
    np.testing.assert_allclose(np.asarray(out_auto), np.asarray(ref), rtol=1e-5, atol=1e-5)

    print("KERNEL_OK")
</pallas_src>

<mosaic_0001>
module attributes {stable_mosaic.version = 11 : i64} {
  func.func @_node_update_kernel(%arg0: i32, %arg1: memref<1024xi32, #tpu.memory_space<smem>>, %arg2: memref<512x64xf32, #tpu.memory_space<any>>, %arg3: memref<64x128xf32, #tpu.memory_space<vmem>>, %arg4: memref<1x128xf32, #tpu.memory_space<vmem>>, %arg5: memref<128x128xf32, #tpu.memory_space<vmem>>, %arg6: memref<512x64xf32, #tpu.memory_space<vmem>>, %arg7: memref<1x!tpu.dma_semaphore, #tpu.memory_space<semaphore_mem>>) attributes {dimension_semantics = [#tpu.dimension_semantics<parallel>], iteration_bounds = array<i64: 2>, scalar_prefetch = 1 : i64, scratch_operands = 2 : i64, tpu.core_type = #tpu.core_type<tc>, window_params = [{}, {pipeline_mode = #tpu.pipeline_mode<synchronous>, transform_indices = @transform_1, window_bounds = array<i64: 64, 128>}, {pipeline_mode = #tpu.pipeline_mode<synchronous>, transform_indices = @transform_2, window_bounds = array<i64: 1, 128>}, {transform_indices = @transform_3, window_bounds = array<i64: 128, 128>}]} {
    %c512_i32 = arith.constant 512 : i32
    %0 = arith.muli %arg0, %c512_i32 : i32
    %c0_i32 = arith.constant 0 : i32
    %c128_i32 = arith.constant 128 : i32
    %1 = arith.addi %c0_i32, %c128_i32 : i32
    %c1_i32 = arith.constant 1 : i32
    scf.for %arg8 = %c0_i32 to %1 step %c1_i32  : i32 {
      %c4_i32 = arith.constant 4 : i32
      %24 = arith.muli %arg8, %c4_i32 : i32
      %25 = arith.addi %0, %24 : i32
      %c0_i32_25 = arith.constant 0 : i32
      %26 = arith.addi %25, %c0_i32_25 : i32
      %27 = arith.index_cast %26 : i32 to index
      %28 = memref.load %arg1[%27] : memref<1024xi32, #tpu.memory_space<smem>>
      %c0_i32_26 = arith.constant 0 : i32
      %29 = arith.addi %c0_i32_26, %arg8 : i32
      %c0_i32_27 = arith.constant 0 : i32
      %c0_i32_28 = arith.constant 0 : i32
      %30 = tpu.memref_slice %arg2[%28, %c0_i32_28] : memref<512x64xf32, #tpu.memory_space<any>> -> memref<1x64xf32, #tpu.memory_space<any>>
      %c0_i32_29 = arith.constant 0 : i32
      %31 = tpu.memref_slice %arg6[%29, %c0_i32_29] : memref<512x64xf32, #tpu.memory_space<vmem>> -> memref<1x64xf32, #tpu.memory_space<vmem>>
      %32 = tpu.memref_slice %arg7[%c0_i32_27] : memref<1x!tpu.dma_semaphore, #tpu.memory_space<semaphore_mem>> -> memref<1x!tpu.dma_semaphore, #tpu.memory_space<semaphore_mem>>
      %33 = tpu.memref_squeeze %32 : memref<1x!tpu.dma_semaphore, #tpu.memory_space<semaphore_mem>> -> memref<!tpu.dma_semaphore, #tpu.memory_space<semaphore_mem>>
      tpu.enqueue_dma source(%30 : memref<1x64xf32, #tpu.memory_space<any>>) target(%31 : memref<1x64xf32, #tpu.memory_space<vmem>>) target_semaphore(%33 : memref<!tpu.dma_semaphore, #tpu.memory_space<semaphore_mem>>)
      %c4_i32_30 = arith.constant 4 : i32
      %34 = arith.muli %arg8, %c4_i32_30 : i32
      %35 = arith.addi %0, %34 : i32
      %c1_i32_31 = arith.constant 1 : i32
      %36 = arith.addi %35, %c1_i32_31 : i32
      %37 = arith.index_cast %36 : i32 to index
      %38 = memref.load %arg1[%37] : memref<1024xi32, #tpu.memory_space<smem>>
      %c128_i32_32 = arith.constant 128 : i32
      %39 = arith.addi %c128_i32_32, %arg8 : i32
      %c0_i32_33 = arith.constant 0 : i32
      %c0_i32_34 = arith.constant 0 : i32
      %40 = tpu.memref_slice %arg2[%38, %c0_i32_34] : memref<512x64xf32, #tpu.memory_space<any>> -> memref<1x64xf32, #tpu.memory_space<any>>
      %c0_i32_35 = arith.constant 0 : i32
      %41 = tpu.memref_slice %arg6[%39, %c0_i32_35] : memref<512x64xf32, #tpu.memory_space<vmem>> -> memref<1x64xf32, #tpu.memory_space<vmem>>
      %42 = tpu.memref_slice %arg7[%c0_i32_33] : memref<1x!tpu.dma_semaphore, #tpu.memory_space<semaphore_mem>> -> memref<1x!tpu.dma_semaphore, #tpu.memory_space<semaphore_mem>>
      %43 = tpu.memref_squeeze %42 : memref<1x!tpu.dma_semaphore, #tpu.memory_space<semaphore_mem>> -> memref<!tpu.dma_semaphore, #tpu.memory_space<semaphore_mem>>
      tpu.enqueue_dma source(%40 : memref<1x64xf32, #tpu.memory_space<any>>) target(%41 : memref<1x64xf32, #tpu.memory_space<vmem>>) target_semaphore(%43 : memref<!tpu.dma_semaphore, #tpu.memory_space<semaphore_mem>>)
      %c4_i32_36 = arith.constant 4 : i32
      %44 = arith.muli %arg8, %c4_i32_36 : i32
      %45 = arith.addi %0, %44 : i32
      %c2_i32 = arith.constant 2 : i32
      %46 = arith.addi %45, %c2_i32 : i32
      %47 = arith.index_cast %46 : i32 to index
      %48 = memref.load %arg1[%47] : memref<1024xi32, #tpu.memory_space<smem>>
      %c256_i32 = arith.constant 256 : i32
      %49 = arith.addi %c256_i32, %arg8 : i32
      %c0_i32_37 = arith.constant 0 : i32
      %c0_i32_38 = arith.constant 0 : i32
      %50 = tpu.memref_slice %arg2[%48, %c0_i32_38] : memref<512x64xf32, #tpu.memory_space<any>> -> memref<1x64xf32, #tpu.memory_space<any>>
      %c0_i32_39 = arith.constant 0 : i32
      %51 = tpu.memref_slice %arg6[%49, %c0_i32_39] : memref<512x64xf32, #tpu.memory_space<vmem>> -> memref<1x64xf32, #tpu.memory_space<vmem>>
      %52 = tpu.memref_slice %arg7[%c0_i32_37] : memref<1x!tpu.dma_semaphore, #tpu.memory_space<semaphore_mem>> -> memref<1x!tpu.dma_semaphore, #tpu.memory_space<semaphore_mem>>
      %53 = tpu.memref_squeeze %52 : memref<1x!tpu.dma_semaphore, #tpu.memory_space<semaphore_mem>> -> memref<!tpu.dma_semaphore, #tpu.memory_space<semaphore_mem>>
      tpu.enqueue_dma source(%50 : memref<1x64xf32, #tpu.memory_space<any>>) target(%51 : memref<1x64xf32, #tpu.memory_space<vmem>>) target_semaphore(%53 : memref<!tpu.dma_semaphore, #tpu.memory_space<semaphore_mem>>)
      %c4_i32_40 = arith.constant 4 : i32
      %54 = arith.muli %arg8, %c4_i32_40 : i32
      %55 = arith.addi %0, %54 : i32
      %c3_i32 = arith.constant 3 : i32
      %56 = arith.addi %55, %c3_i32 : i32
      %57 = arith.index_cast %56 : i32 to index
      %58 = memref.load %arg1[%57] : memref<1024xi32, #tpu.memory_space<smem>>
      %c384_i32 = arith.constant 384 : i32
      %59 = arith.addi %c384_i32, %arg8 : i32
      %c0_i32_41 = arith.constant 0 : i32
      %c0_i32_42 = arith.constant 0 : i32
      %60 = tpu.memref_slice %arg2[%58, %c0_i32_42] : memref<512x64xf32, #tpu.memory_space<any>> -> memref<1x64xf32, #tpu.memory_space<any>>
      %c0_i32_43 = arith.constant 0 : i32
      %61 = tpu.memref_slice %arg6[%59, %c0_i32_43] : memref<512x64xf32, #tpu.memory_space<vmem>> -> memref<1x64xf32, #tpu.memory_space<vmem>>
      %62 = tpu.memref_slice %arg7[%c0_i32_41] : memref<1x!tpu.dma_semaphore, #tpu.memory_space<semaphore_mem>> -> memref<1x!tpu.dma_semaphore, #tpu.memory_space<semaphore_mem>>
      %63 = tpu.memref_squeeze %62 : memref<1x!tpu.dma_semaphore, #tpu.memory_space<semaphore_mem>> -> memref<!tpu.dma_semaphore, #tpu.memory_space<semaphore_mem>>
      tpu.enqueue_dma source(%60 : memref<1x64xf32, #tpu.memory_space<any>>) target(%61 : memref<1x64xf32, #tpu.memory_space<vmem>>) target_semaphore(%63 : memref<!tpu.dma_semaphore, #tpu.memory_space<semaphore_mem>>)
    }
    %c128_i32_0 = arith.constant 128 : i32
    %c0_i32_1 = arith.constant 0 : i32
    %c128_i32_2 = arith.constant 128 : i32
    %2 = arith.addi %c0_i32_1, %c128_i32_2 : i32
    %c1_i32_3 = arith.constant 1 : i32
    scf.for %arg8 = %c0_i32_1 to %2 step %c1_i32_3  : i32 {
      %c0_i32_25 = arith.constant 0 : i32
      %24 = arith.addi %c0_i32_25, %arg8 : i32
      %c0_i32_26 = arith.constant 0 : i32
      %c0_i32_27 = arith.constant 0 : i32
      %c0_i32_28 = arith.constant 0 : i32
      %25 = tpu.memref_slice %arg2[%c0_i32_27, %c0_i32_28] : memref<512x64xf32, #tpu.memory_space<any>> -> memref<1x64xf32, #tpu.memory_space<any>>
      %c0_i32_29 = arith.constant 0 : i32
      %26 = tpu.memref_slice %arg6[%24, %c0_i32_29] : memref<512x64xf32, #tpu.memory_space<vmem>> -> memref<1x64xf32, #tpu.memory_space<vmem>>
      %27 = tpu.memref_slice %arg7[%c0_i32_26] : memref<1x!tpu.dma_semaphore, #tpu.memory_space<semaphore_mem>> -> memref<1x!tpu.dma_semaphore, #tpu.memory_space<semaphore_mem>>
      %28 = tpu.memref_squeeze %27 : memref<1x!tpu.dma_semaphore, #tpu.memory_space<semaphore_mem>> -> memref<!tpu.dma_semaphore, #tpu.memory_space<semaphore_mem>>
      tpu.wait_dma2 semaphore(%28 : memref<!tpu.dma_semaphore, #tpu.memory_space<semaphore_mem>>) src(%25 : memref<1x64xf32, #tpu.memory_space<any>>) dst(%26 : memref<1x64xf32, #tpu.memory_space<vmem>>)
      %c128_i32_30 = arith.constant 128 : i32
      %29 = arith.addi %c128_i32_30, %arg8 : i32
      %c0_i32_31 = arith.constant 0 : i32
      %c0_i32_32 = arith.constant 0 : i32
      %c0_i32_33 = arith.constant 0 : i32
      %30 = tpu.memref_slice %arg2[%c0_i32_32, %c0_i32_33] : memref<512x64xf32, #tpu.memory_space<any>> -> memref<1x64xf32, #tpu.memory_space<any>>
      %c0_i32_34 = arith.constant 0 : i32
      %31 = tpu.memref_slice %arg6[%29, %c0_i32_34] : memref<512x64xf32, #tpu.memory_space<vmem>> -> memref<1x64xf32, #tpu.memory_space<vmem>>
      %32 = tpu.memref_slice %arg7[%c0_i32_31] : memref<1x!tpu.dma_semaphore, #tpu.memory_space<semaphore_mem>> -> memref<1x!tpu.dma_semaphore, #tpu.memory_space<semaphore_mem>>
      %33 = tpu.memref_squeeze %32 : memref<1x!tpu.dma_semaphore, #tpu.memory_space<semaphore_mem>> -> memref<!tpu.dma_semaphore, #tpu.memory_space<semaphore_mem>>
      tpu.wait_dma2 semaphore(%33 : memref<!tpu.dma_semaphore, #tpu.memory_space<semaphore_mem>>) src(%30 : memref<1x64xf32, #tpu.memory_space<any>>) dst(%31 : memref<1x64xf32, #tpu.memory_space<vmem>>)
      %c256_i32 = arith.constant 256 : i32
      %34 = arith.addi %c256_i32, %arg8 : i32
      %c0_i32_35 = arith.constant 0 : i32
      %c0_i32_36 = arith.constant 0 : i32
      %c0_i32_37 = arith.constant 0 : i32
      %35 = tpu.memref_slice %arg2[%c0_i32_36, %c0_i32_37] : memref<512x64xf32, #tpu.memory_space<any>> -> memref<1x64xf32, #tpu.memory_space<any>>
      %c0_i32_38 = arith.constant 0 : i32
      %36 = tpu.memref_slice %arg6[%34, %c0_i32_38] : memref<512x64xf32, #tpu.memory_space<vmem>> -> memref<1x64xf32, #tpu.memory_space<vmem>>
      %37 = tpu.memref_slice %arg7[%c0_i32_35] : memref<1x!tpu.dma_semaphore, #tpu.memory_space<semaphore_mem>> -> memref<1x!tpu.dma_semaphore, #tpu.memory_space<semaphore_mem>>
      %38 = tpu.memref_squeeze %37 : memref<1x!tpu.dma_semaphore, #tpu.memory_space<semaphore_mem>> -> memref<!tpu.dma_semaphore, #tpu.memory_space<semaphore_mem>>
      tpu.wait_dma2 semaphore(%38 : memref<!tpu.dma_semaphore, #tpu.memory_space<semaphore_mem>>) src(%35 : memref<1x64xf32, #tpu.memory_space<any>>) dst(%36 : memref<1x64xf32, #tpu.memory_space<vmem>>)
      %c384_i32 = arith.constant 384 : i32
      %39 = arith.addi %c384_i32, %arg8 : i32
      %c0_i32_39 = arith.constant 0 : i32
      %c0_i32_40 = arith.constant 0 : i32
      %c0_i32_41 = arith.constant 0 : i32
      %40 = tpu.memref_slice %arg2[%c0_i32_40, %c0_i32_41] : memref<512x64xf32, #tpu.memory_space<any>> -> memref<1x64xf32, #tpu.memory_space<any>>
      %c0_i32_42 = arith.constant 0 : i32
      %41 = tpu.memref_slice %arg6[%39, %c0_i32_42] : memref<512x64xf32, #tpu.memory_space<vmem>> -> memref<1x64xf32, #tpu.memory_space<vmem>>
      %42 = tpu.memref_slice %arg7[%c0_i32_39] : memref<1x!tpu.dma_semaphore, #tpu.memory_space<semaphore_mem>> -> memref<1x!tpu.dma_semaphore, #tpu.memory_space<semaphore_mem>>
      %43 = tpu.memref_squeeze %42 : memref<1x!tpu.dma_semaphore, #tpu.memory_space<semaphore_mem>> -> memref<!tpu.dma_semaphore, #tpu.memory_space<semaphore_mem>>
      tpu.wait_dma2 semaphore(%43 : memref<!tpu.dma_semaphore, #tpu.memory_space<semaphore_mem>>) src(%40 : memref<1x64xf32, #tpu.memory_space<any>>) dst(%41 : memref<1x64xf32, #tpu.memory_space<vmem>>)
    }
    %c128_i32_4 = arith.constant 128 : i32
    %c0 = arith.constant 0 : index
    %c0_5 = arith.constant 0 : index
    %3 = vector.load %arg6[%c0, %c0_5] : memref<512x64xf32, #tpu.memory_space<vmem>>, vector<128x64xf32>
    %c0_6 = arith.constant 0 : index
    %c0_7 = arith.constant 0 : index
    %4 = vector.load %arg3[%c0_6, %c0_7] : memref<64x128xf32, #tpu.memory_space<vmem>>, vector<64x128xf32>
    %cst = arith.constant dense<0.000000e+00> : vector<128x128xf32>
    %5 = tpu.matmul %3, %4, %cst {dimension_numbers = #tpu.dot_dimension_numbers<[1], [0], [0], [1], [0, 0, 1, 1], [], []>} : vector<128x64xf32>, vector<64x128xf32>, vector<128x128xf32> -> vector<128x128xf32>
    %c128 = arith.constant 128 : index
    %c0_8 = arith.constant 0 : index
    %6 = vector.load %arg6[%c128, %c0_8] : memref<512x64xf32, #tpu.memory_space<vmem>>, vector<128x64xf32>
    %c0_9 = arith.constant 0 : index
    %c0_10 = arith.constant 0 : index
    %7 = vector.load %arg3[%c0_9, %c0_10] : memref<64x128xf32, #tpu.memory_space<vmem>>, vector<64x128xf32>
    %cst_11 = arith.constant dense<0.000000e+00> : vector<128x128xf32>
    %8 = tpu.matmul %6, %7, %cst_11 {dimension_numbers = #tpu.dot_dimension_numbers<[1], [0], [0], [1], [0, 0, 1, 1], [], []>} : vector<128x64xf32>, vector<64x128xf32>, vector<128x128xf32> -> vector<128x128xf32>
    %9 = arith.addf %5, %8 : vector<128x128xf32>
    %c256 = arith.constant 256 : index
    %c0_12 = arith.constant 0 : index
    %10 = vector.load %arg6[%c256, %c0_12] : memref<512x64xf32, #tpu.memory_space<vmem>>, vector<128x64xf32>
    %c0_13 = arith.constant 0 : index
    %c0_14 = arith.constant 0 : index
    %11 = vector.load %arg3[%c0_13, %c0_14] : memref<64x128xf32, #tpu.memory_space<vmem>>, vector<64x128xf32>
    %cst_15 = arith.constant dense<0.000000e+00> : vector<128x128xf32>
    %12 = tpu.matmul %10, %11, %cst_15 {dimension_numbers = #tpu.dot_dimension_numbers<[1], [0], [0], [1], [0, 0, 1, 1], [], []>} : vector<128x64xf32>, vector<64x128xf32>, vector<128x128xf32> -> vector<128x128xf32>
    %13 = arith.addf %9, %12 : vector<128x128xf32>
    %c384 = arith.constant 384 : index
    %c0_16 = arith.constant 0 : index
    %14 = vector.load %arg6[%c384, %c0_16] : memref<512x64xf32, #tpu.memory_space<vmem>>, vector<128x64xf32>
    %c0_17 = arith.constant 0 : index
    %c0_18 = arith.constant 0 : index
    %15 = vector.load %arg3[%c0_17, %c0_18] : memref<64x128xf32, #tpu.memory_space<vmem>>, vector<64x128xf32>
    %cst_19 = arith.constant dense<0.000000e+00> : vector<128x128xf32>
    %16 = tpu.matmul %14, %15, %cst_19 {dimension_numbers = #tpu.dot_dimension_numbers<[1], [0], [0], [1], [0, 0, 1, 1], [], []>} : vector<128x64xf32>, vector<64x128xf32>, vector<128x128xf32> -> vector<128x128xf32>
    %17 = arith.addf %13, %16 : vector<128x128xf32>
    %c0_20 = arith.constant 0 : index
    %c0_21 = arith.constant 0 : index
    %18 = vector.load %arg4[%c0_20, %c0_21] : memref<1x128xf32, #tpu.memory_space<vmem>>, vector<1x128xf32>
    %19 = vector.broadcast %18 : vector<1x128xf32> to vector<128x128xf32>
    %20 = arith.addf %17, %19 : vector<128x128xf32>
    %cst_22 = arith.constant 0.000000e+00 : f32
    %21 = vector.broadcast %cst_22 : f32 to vector<128x128xf32>
    %22 = arith.maximumf %20, %21 : vector<128x128xf32>
    %c0_23 = arith.constant 0 : index
    %c0_24 = arith.constant 0 : index
    %23 = vector.load %arg5[%c0_23, %c0_24] : memref<128x128xf32, #tpu.memory_space<vmem>>, vector<128x128xf32>
    tpu.vector_store %arg5[%c0_23, %c0_24], %22 {strides = array<i32>} : memref<128x128xf32, #tpu.memory_space<vmem>>, vector<128x128xf32>,
    return
  }
  func.func @transform_1(%arg0: i32, %arg1: memref<1024xi32, #tpu.memory_space<smem>>) -> (i32, i32) {
    %c0_i32 = arith.constant 0 : i32
    %c0_i32_0 = arith.constant 0 : i32
    %c0_i32_1 = arith.constant 0 : i32
    return %c0_i32, %c0_i32_0 : i32, i32
  }
  func.func @transform_2(%arg0: i32, %arg1: memref<1024xi32, #tpu.memory_space<smem>>) -> (i32, i32) {
    %c0_i32 = arith.constant 0 : i32
    %c0_i32_0 = arith.constant 0 : i32
    %c0_i32_1 = arith.constant 0 : i32
    return %c0_i32, %c0_i32_0 : i32, i32
  }
  func.func @transform_3(%arg0: i32, %arg1: memref<1024xi32, #tpu.memory_space<smem>>) -> (i32, i32) {
    %c0_i32 = arith.constant 0 : i32
    %c0_i32_0 = arith.constant 0 : i32
    return %arg0, %c0_i32 : i32, i32
  }
}

</mosaic_0001>

<llo_original>
// kernel: tpu_custom_call.1
$region0: #{tpu_custom_call.1}
  #allocation0 [shape = 'u32[]', space=smem, size = 0x4, offset = 0x4, fixed_abs, tag = 'smem constant byte address 0x4 - core index']
  #allocation1 [shape = 'u32[144,128]{1,0:T(1,128)}', space=vmem, size = 0x12000, scoped, tag = 'internal scratch']
  #allocation2 [shape = 'f32[512,64]{1,0:T(8,128)}', space=vmem, size = 0x40000, scoped, tag = 'scratch operand']
  #allocation3 [shape = 's32[1]{0}', space=sflag, size = 0x4, scoped, tag = 'scratch operand']
  #allocation4 [shape = 's32[1]{0}', space=sflag, size = 0x4, scoped, tag = 'scoped memory for tpu_custom_call.1']
  #allocation5 [shape = 'u8[4096]{0}', space=smem, size = 0x1000, scoped, tag = 'prefetched SMEM operand 0']
  #allocation8 [shape = 's32[]', space=sflag, size = 0x4, offset = 0, fixed_abs, tag = 'sflag constant byte address 0x0 - dummy sync flag']
  #allocation9 [shape = 's32[]', space=sflag, size = 0x4, offset = 0, fixed_abs, tag = 'sflag constant byte address 0x0 - dummy sync flag']
  #allocation10 [shape = 's32[]', space=sflag, size = 0x4, offset = 0, fixed_abs, tag = 'sflag constant byte address 0x0 - dummy sync flag']
  #allocation11 [shape = 's32[]', space=sflag, size = 0x4, offset = 0, fixed_abs, tag = 'sflag constant byte address 0x0 - dummy sync flag']
  %s0 = inlined_call_operand.vmem [shape: s32[1024], index: 0, kind: input, shape index: {}]
  %s1 = inlined_call_operand.vmem [shape: f32[512,64], index: 1, kind: input, shape index: {}]
  %s2 = inlined_call_operand.vmem [shape: f32[64,128], index: 2, kind: input, shape index: {}]
  %s3 = inlined_call_operand.vmem [shape: f32[1,128], index: 3, kind: input, shape index: {}]
  %s4 = inlined_call_operand.hbm [shape: f32[256,128], index: 4, kind: output, shape index: {}]
  %s5 = sld [smem:[#allocation0]]
  $region175: #{tpu_custom_call.1} parent=0
    _
  %s7 = ssub.s32 1, %s5
  %s8 = scalar_select 0, %s7, %s5
  %s9 = sshll.u32 %s0, 4
  %s10 = int_to_ptr.vmem [resolvable:$true] %s9
  %12 = dma.vmem_to_smem %s10, 128, [#allocation5], [#allocation4]
  %13 = dma.done [#allocation4], 128
  %14 = sfence
  $region1: #{tpu_custom_call.1} parent=0
    #allocation6 [shape = 'u8[131072]{0}', space=vmem, size = 0x20000, scoped, tag = 'output window, operand 0']
    #allocation7 [shape = 's32[2]{0}', space=sflag, size = 0x8, scoped, tag = 'scoped memory for tpu_custom_call.1']
    %15 = vsyncpa [#allocation7], 0
    %s16 = scalar_lea.sflag [#allocation7], 1
    %17 = vsyncpa %s16, 0
    loop: start=0, step=1, limit=4
    $region2: #{tpu_custom_call.1} parent=1 // loop_pre_header
      _
    $region3: #{tpu_custom_call.1} parent=1 // loop_header
      %s19 = sphi 0, %s23
      %p20 = scmp.ge.s32.totalorder %s19, 4
      %s27 = sphi 0, %s27
      %s29 = sphi 0, %s27
      %s30 = sphi 0, %s29
      %s44 = sphi 0, %s30
      %s48 = sphi 0, %s48
      %s50 = sphi 0, %s48
      %s51 = sphi 0, %s50
      %s65 = sphi 0, %s51
      %s71 = sphi 0, %s73
      %s74 = sphi 0, %s71
      %s75 = sphi 0, %s74
      %s91 = sphi 0, %s75
    $region4: #{tpu_custom_call.1} parent=1 // loop_header_branch
      %22 = sbr.rel (%p20) target = $region8
    $region5: #{tpu_custom_call.1} parent=1 // loop_body
      %s24 = ssub.s32 %s19, 1
      %s25 = ssub.s32 %s19, 2
      %s26 = sadd.s32 %s19, 1
      %s28 = sadd.s32 %s27, 1
      %p31 = scmp.eq.s32.totalorder %s19, 1
      %p32 = scmp.ne.s32.totalorder %s27, %s29
      %p33 = scmp.eq.s32.totalorder %s19, 0
      %p34 = por %p32, %p33
      %p35 = scmp.ne.s32.totalorder %s27, %s29
      %p36 = scmp.eq.s32.totalorder %s24, 1
      %p37 = por %p35, %p36
      %p38 = scmp.ne.s32.totalorder %s29, %s30
      %p39 = scmp.eq.s32.totalorder %s24, 0
      %p40 = por %p38, %p39
      %p41 = scmp.ne.s32.totalorder %s29, %s30
      %p42 = scmp.eq.s32.totalorder %s25, 1
      %p43 = por %p41, %p42
      %p45 = scmp.ne.s32.totalorder %s30, %s44
      %p46 = scmp.eq.s32.totalorder %s25, 0
      %p47 = por %p45, %p46
      %s49 = sadd.s32 %s48, 1
      %p52 = scmp.eq.s32.totalorder %s19, 1
      %p53 = scmp.ne.s32.totalorder %s48, %s50
      %p54 = scmp.eq.s32.totalorder %s19, 0
      %p55 = por %p53, %p54
      %p56 = scmp.ne.s32.totalorder %s48, %s50
      %p57 = scmp.eq.s32.totalorder %s24, 1
      %p58 = por %p56, %p57
      %p59 = scmp.ne.s32.totalorder %s50, %s51
      %p60 = scmp.eq.s32.totalorder %s24, 0
      %p61 = por %p59, %p60
      %p62 = scmp.ne.s32.totalorder %s50, %s51
      %p63 = scmp.eq.s32.totalorder %s25, 1
      %p64 = por %p62, %p63
      %p66 = scmp.ne.s32.totalorder %s51, %s65
      %p67 = scmp.eq.s32.totalorder %s25, 0
      %p68 = por %p66, %p67
      %s69 = ssub.s32 %s19, %s26
      %p70 = scmp.eq.s32.totalorder %s69, 0
      %s72 = sadd.s32 %s71, 1
      %s73 = scalar_select %p70, %s71, %s72
      %p76 = pneg %p70
      %p77 = scmp.eq.s32.totalorder %s19, 1
      %p78 = por %p76, %p77
      %p79 = scmp.ne.s32.totalorder %s71, %s74
      %p80 = scmp.eq.s32.totalorder %s19, 0
      %p81 = por %p79, %p80
      %p82 = scmp.ne.s32.totalorder %s71, %s74
      %p83 = scmp.eq.s32.totalorder %s24, 1
      %p84 = por %p82, %p83
      %p85 = scmp.ne.s32.totalorder %s74, %s75
      %p86 = scmp.eq.s32.totalorder %s24, 0
      %p87 = por %p85, %p86
      %p88 = scmp.ne.s32.totalorder %s74, %s75
      %p89 = scmp.eq.s32.totalorder %s25, 1
      %p90 = por %p88, %p89
      %p92 = scmp.ne.s32.totalorder %s75, %s91
      %p93 = scmp.eq.s32.totalorder %s25, 0
      %p94 = por %p92, %p93
      %p95 = scmp.le.s32.totalorder 1, %s19
      %p96 = scmp.lt.s32.totalorder %s19, 3
      %p97 = pnand %p95, %p96
      %p98 = pneg %p97
      // Predicated region
      $region9: #{tpu_custom_call.1} parent=5 // pred_check
        _
      $region10: #{tpu_custom_call.1} parent=5 // pred_check_branch
        %100 = sbr.rel (%p97) target = $region12
      $region11: #{tpu_custom_call.1} parent=5 // pred_region
        %s101 = ssub.s32 %s19, 1
        // Predicated region
        $region13: #{tpu_custom_call.1} parent=11 // pred_check
          %p102 = pneg %p40
        $region14: #{tpu_custom_call.1} parent=11 // pred_check_branch
          %104 = sbr.rel (%p102) target = $region16
        $region15: #{tpu_custom_call.1} parent=11 // pred_region
          _
        $region16: #{tpu_custom_call.1} parent=11 // pred_fallthru
          _
        // Predicated region
        $region17: #{tpu_custom_call.1} parent=11 // pred_check
          %p105 = pneg %p61
        $region18: #{tpu_custom_call.1} parent=11 // pred_check_branch
          %107 = sbr.rel (%p105) target = $region20
        $region19: #{tpu_custom_call.1} parent=11 // pred_region
          _
        $region20: #{tpu_custom_call.1} parent=11 // pred_fallthru
          _
      $region12: #{tpu_custom_call.1} parent=5 // pred_fallthru
        _
      %p108 = scmp.lt.s32.totalorder %s19, 2
      // Predicated region
      $region21: #{tpu_custom_call.1} parent=5 // pred_check
        %p109 = pneg %p108
      $region22: #{tpu_custom_call.1} parent=5 // pred_check_branch
        %111 = sbr.rel (%p109) target = $region24
      $region23: #{tpu_custom_call.1} parent=5 // pred_region
        _
      $region24: #{tpu_custom_call.1} parent=5 // pred_fallthru
        _
      %p112 = scmp.le.s32.totalorder 1, %s19
      %p113 = scmp.lt.s32.totalorder %s19, 3
      %p114 = pnand %p112, %p113
      %p115 = pneg %p114
      // Predicated region
      $region25: #{tpu_custom_call.1} parent=5 // pred_check
        _
      $region26: #{tpu_custom_call.1} parent=5 // pred_check_branch
        %117 = sbr.rel (%p114) target = $region28
      $region27: #{tpu_custom_call.1} parent=5 // pred_region
        %s118 = ssub.s32 %s19, 1
        %p119 = pneg %p40
        %p120 = pneg %p37
        %p121 = pneg %p61
        %p122 = pneg %p58
        %p123 = pneg %p87
        %p124 = pneg %p84
        %s125 = sand.u32 %s74, 1
        %s126 = scalar_lea.sflag [#allocation7], %s125
        %s127 = sand.u32 %s74, 1
        %s128 = smul.addr %s127, 128
        %s129 = scalar_lea.vmem [#allocation6], %s128
        %s130 = smul.u32 16, %s24
        %s131 = smul.u32 %s24, 512
        loop: start=0, step=1, limit=128
        $region29: #{tpu_custom_call.1} parent=27 // loop_pre_header
          _
        $region30: #{tpu_custom_call.1} parent=27 // loop_header
          %s133 = sphi 0, %s137
          %p134 = scmp.ge.s32.totalorder %s133, 128
        $region31: #{tpu_custom_call.1} parent=27 // loop_header_branch
          %136 = sbr.rel (%p134) target = $region35
        $region32: #{tpu_custom_call.1} parent=27 // loop_body
          %s138 = smul.u32 %s133, 4
          %s139 = sadd.s32 %s131, %s138
          %s140 = sld [smem:[#allocation5 + %s139]]
          %s141 = scalar_lea.vmem %s1, %s140
          %s142 = scalar_lea.vmem [#allocation2], %s133
          %p144 = scmp.lt.u32.totalorder 1, 8
          %p145 = pneg %p144
          // Predicated region
          $region36: #{tpu_custom_call.1} parent=32 // pred_check
            _
          $region37: #{tpu_custom_call.1} parent=32 // pred_check_branch
            %147 = sbr.rel (%p144) target = $region39
          $region38: #{tpu_custom_call.1} parent=32 // pred_region
            %s162 = sand.u32 1, 7
            %p163 = scmp.eq.s32.totalorder %s162, 0
            %p164 = pneg %p163
            // Predicated region
            $region51: #{tpu_custom_call.1} parent=38 // pred_check
              _
            $region52: #{tpu_custom_call.1} parent=38 // pred_check_branch
              %166 = sbr.rel (%p163) target = $region54
            $region53: #{tpu_custom_call.1} parent=38 // pred_region
              %s167 = sand.u32 1, 7
              %s168 = ssub.s32 1, %s167
              %s169 = scalar_lea.vmem %s141, %s168
              %s170 = ssub.s32 1, %s167
              %s171 = scalar_lea.vmem %s142, %s170 [#allocation2]
              %s172 = sshllo.u32 0, %s167
              loop: start=0, step=1, limit=1
              $region55: #{tpu_custom_call.1} parent=53 // loop_pre_header
                _
              $region56: #{tpu_custom_call.1} parent=53 // loop_header
                %s174 = sphi 0, %s178
                %p175 = scmp.ge.s32.totalorder %s174, 1
                %s179 = sphi %s169, %s169
                %s180 = sphi %s171, %s171
              $region57: #{tpu_custom_call.1} parent=53 // loop_header_branch
                %177 = sbr.rel (%p175) target = $region61
              $region58: #{tpu_custom_call.1} parent=53 // loop_body
                %v181 = vld [vmem:[%s179] sm:%s172]
                %182 = vst [vmem:[%s180] sm:%s172] %v181
              $region59: #{tpu_custom_call.1} parent=53 // loop_footer
                %s178 = sadd.s32 1, %s174
              $region60: #{tpu_custom_call.1} parent=53 // loop_footer_branch
                %173 = sbr.rel target = $region56
              $region61: #{tpu_custom_call.1} parent=53 // loop_exit
                _
            $region54: #{tpu_custom_call.1} parent=38 // pred_fallthru
              _
          $region39: #{tpu_custom_call.1} parent=32 // pred_fallthru
            _
          // Predicated region
          $region40: #{tpu_custom_call.1} parent=32 // pred_check
            %p148 = pneg %p144
          $region41: #{tpu_custom_call.1} parent=32 // pred_check_branch
            %150 = sbr.rel (%p148) target = $region43
          $region42: #{tpu_custom_call.1} parent=32 // pred_region
            %s151 = sshllo.u32 0, 1
            loop: start=0, step=1, limit=1
            $region44: #{tpu_custom_call.1} parent=42 // loop_pre_header
              _
            $region45: #{tpu_custom_call.1} parent=42 // loop_header
              %s153 = sphi 0, %s157
              %p154 = scmp.ge.s32.totalorder %s153, 1
              %s158 = sphi %s141, %s141
              %s159 = sphi %s142, %s142
            $region46: #{tpu_custom_call.1} parent=42 // loop_header_branch
              %156 = sbr.rel (%p154) target = $region50
            $region47: #{tpu_custom_call.1} parent=42 // loop_body
              %v160 = vld [vmem:[%s158] sm:%s151]
              %161 = vst [vmem:[%s159] sm:%s151] %v160
            $region48: #{tpu_custom_call.1} parent=42 // loop_footer
              %s157 = sadd.s32 1, %s153
            $region49: #{tpu_custom_call.1} parent=42 // loop_footer_branch
              %152 = sbr.rel target = $region45
            $region50: #{tpu_custom_call.1} parent=42 // loop_exit
              _
          $region43: #{tpu_custom_call.1} parent=32 // pred_fallthru
            _
          // Predicated region
          $region62: #{tpu_custom_call.1} parent=32 // pred_check
            _
          $region63: #{tpu_custom_call.1} parent=32 // pred_check_branch
            %185 = sbr.rel (0) target = $region65
          $region64: #{tpu_custom_call.1} parent=32 // pred_region
            %186 = vsyncadd [#allocation3], 16
          $region65: #{tpu_custom_call.1} parent=32 // pred_fallthru
            _
          %s187 = sadd.s32 %s139, 1
          %s188 = sld [smem:[#allocation5 + %s187]]
          %s189 = sadd.s32 %s133, 128
          %s190 = scalar_lea.vmem %s1, %s188
          %s191 = scalar_lea.vmem [#allocation2], %s189
          %p193 = scmp.lt.u32.totalorder 1, 8
          %p194 = pneg %p193
          // Predicated region
          $region66: #{tpu_custom_call.1} parent=32 // pred_check
            _
          $region67: #{tpu_custom_call.1} parent=32 // pred_check_branch
            %196 = sbr.rel (%p193) target = $region69
          $region68: #{tpu_custom_call.1} parent=32 // pred_region
            %s211 = sand.u32 1, 7
            %p212 = scmp.eq.s32.totalorder %s211, 0
            %p213 = pneg %p212
            // Predicated region
            $region81: #{tpu_custom_call.1} parent=68 // pred_check
              _
            $region82: #{tpu_custom_call.1} parent=68 // pred_check_branch
              %215 = sbr.rel (%p212) target = $region84
            $region83: #{tpu_custom_call.1} parent=68 // pred_region
              %s216 = sand.u32 1, 7
              %s217 = ssub.s32 1, %s216
              %s218 = scalar_lea.vmem %s190, %s217
              %s219 = ssub.s32 1, %s216
              %s220 = scalar_lea.vmem %s191, %s219 [#allocation2]
              %s221 = sshllo.u32 0, %s216
              loop: start=0, step=1, limit=1
              $region85: #{tpu_custom_call.1} parent=83 // loop_pre_header
                _
              $region86: #{tpu_custom_call.1} parent=83 // loop_header
                %s223 = sphi 0, %s227
                %p224 = scmp.ge.s32.totalorder %s223, 1
                %s228 = sphi %s218, %s218
                %s229 = sphi %s220, %s220
              $region87: #{tpu_custom_call.1} parent=83 // loop_header_branch
                %226 = sbr.rel (%p224) target = $region91
              $region88: #{tpu_custom_call.1} parent=83 // loop_body
                %v230 = vld [vmem:[%s228] sm:%s221]
                %231 = vst [vmem:[%s229] sm:%s221] %v230
              $region89: #{tpu_custom_call.1} parent=83 // loop_footer
                %s227 = sadd.s32 1, %s223
              $region90: #{tpu_custom_call.1} parent=83 // loop_footer_branch
                %222 = sbr.rel target = $region86
              $region91: #{tpu_custom_call.1} parent=83 // loop_exit
                _
            $region84: #{tpu_custom_call.1} parent=68 // pred_fallthru
              _
          $region69: #{tpu_custom_call.1} parent=32 // pred_fallthru
            _
          // Predicated region
          $region70: #{tpu_custom_call.1} parent=32 // pred_check
            %p197 = pneg %p193
          $region71: #{tpu_custom_call.1} parent=32 // pred_check_branch
            %199 = sbr.rel (%p197) target = $region73
          $region72: #{tpu_custom_call.1} parent=32 // pred_region
            %s200 = sshllo.u32 0, 1
            loop: start=0, step=1, limit=1
            $region74: #{tpu_custom_call.1} parent=72 // loop_pre_header
              _
            $region75: #{tpu_custom_call.1} parent=72 // loop_header
              %s202 = sphi 0, %s206
              %p203 = scmp.ge.s32.totalorder %s202, 1
              %s207 = sphi %s190, %s190
              %s208 = sphi %s191, %s191
            $region76: #{tpu_custom_call.1} parent=72 // loop_header_branch
              %205 = sbr.rel (%p203) target = $region80
            $region77: #{tpu_custom_call.1} parent=72 // loop_body
              %v209 = vld [vmem:[%s207] sm:%s200]
              %210 = vst [vmem:[%s208] sm:%s200] %v209
            $region78: #{tpu_custom_call.1} parent=72 // loop_footer
              %s206 = sadd.s32 1, %s202
            $region79: #{tpu_custom_call.1} parent=72 // loop_footer_branch
              %201 = sbr.rel target = $region75
            $region80: #{tpu_custom_call.1} parent=72 // loop_exit
              _
          $region73: #{tpu_custom_call.1} parent=32 // pred_fallthru
            _
          // Predicated region
          $region92: #{tpu_custom_call.1} parent=32 // pred_check
            _
          $region93: #{tpu_custom_call.1} parent=32 // pred_check_branch
            %234 = sbr.rel (0) target = $region95
          $region94: #{tpu_custom_call.1} parent=32 // pred_region
            %235 = vsyncadd [#allocation3], 16
          $region95: #{tpu_custom_call.1} parent=32 // pred_fallthru
            _
          %s236 = sadd.s32 %s139, 2
          %s237 = sld [smem:[#allocation5 + %s236]]
          %s238 = sadd.s32 %s133, 256
          %s239 = scalar_lea.vmem %s1, %s237
          %s240 = scalar_lea.vmem [#allocation2], %s238
          %p242 = scmp.lt.u32.totalorder 1, 8
          %p243 = pneg %p242
          // Predicated region
          $region96: #{tpu_custom_call.1} parent=32 // pred_check
            _
          $region97: #{tpu_custom_call.1} parent=32 // pred_check_branch
            %245 = sbr.rel (%p242) target = $region99
          $region98: #{tpu_custom_call.1} parent=32 // pred_region
            %s260 = sand.u32 1, 7
            %p261 = scmp.eq.s32.totalorder %s260, 0
            %p262 = pneg %p261
            // Predicated region
            $region111: #{tpu_custom_call.1} parent=98 // pred_check
              _
            $region112: #{tpu_custom_call.1} parent=98 // pred_check_branch
              %264 = sbr.rel (%p261) target = $region114
            $region113: #{tpu_custom_call.1} parent=98 // pred_region
              %s265 = sand.u32 1, 7
              %s266 = ssub.s32 1, %s265
              %s267 = scalar_lea.vmem %s239, %s266
              %s268 = ssub.s32 1, %s265
              %s269 = scalar_lea.vmem %s240, %s268 [#allocation2]
              %s270 = sshllo.u32 0, %s265
              loop: start=0, step=1, limit=1
              $region115: #{tpu_custom_call.1} parent=113 // loop_pre_header
                _
              $region116: #{tpu_custom_call.1} parent=113 // loop_header
                %s272 = sphi 0, %s276
                %p273 = scmp.ge.s32.totalorder %s272, 1
                %s277 = sphi %s267, %s267
                %s278 = sphi %s269, %s269
              $region117: #{tpu_custom_call.1} parent=113 // loop_header_branch
                %275 = sbr.rel (%p273) target = $region121
              $region118: #{tpu_custom_call.1} parent=113 // loop_body
                %v279 = vld [vmem:[%s277] sm:%s270]
                %280 = vst [vmem:[%s278] sm:%s270] %v279
              $region119: #{tpu_custom_call.1} parent=113 // loop_footer
                %s276 = sadd.s32 1, %s272
              $region120: #{tpu_custom_call.1} parent=113 // loop_footer_branch
                %271 = sbr.rel target = $region116
              $region121: #{tpu_custom_call.1} parent=113 // loop_exit
                _
            $region114: #{tpu_custom_call.1} parent=98 // pred_fallthru
              _
          $region99: #{tpu_custom_call.1} parent=32 // pred_fallthru
            _
          // Predicated region
          $region100: #{tpu_custom_call.1} parent=32 // pred_check
            %p246 = pneg %p242
          $region101: #{tpu_custom_call.1} parent=32 // pred_check_branch
            %248 = sbr.rel (%p246) target = $region103
          $region102: #{tpu_custom_call.1} parent=32 // pred_region
            %s249 = sshllo.u32 0, 1
            loop: start=0, step=1, limit=1
            $region104: #{tpu_custom_call.1} parent=102 // loop_pre_header
              _
            $region105: #{tpu_custom_call.1} parent=102 // loop_header
              %s251 = sphi 0, %s255
              %p252 = scmp.ge.s32.totalorder %s251, 1
              %s256 = sphi %s239, %s239
              %s257 = sphi %s240, %s240
            $region106: #{tpu_custom_call.1} parent=102 // loop_header_branch
              %254 = sbr.rel (%p252) target = $region110
            $region107: #{tpu_custom_call.1} parent=102 // loop_body
              %v258 = vld [vmem:[%s256] sm:%s249]
              %259 = vst [vmem:[%s257] sm:%s249] %v258
            $region108: #{tpu_custom_call.1} parent=102 // loop_footer
              %s255 = sadd.s32 1, %s251
            $region109: #{tpu_custom_call.1} parent=102 // loop_footer_branch
              %250 = sbr.rel target = $region105
            $region110: #{tpu_custom_call.1} parent=102 // loop_exit
              _
          $region103: #{tpu_custom_call.1} parent=32 // pred_fallthru
            _
          // Predicated region
          $region122: #{tpu_custom_call.1} parent=32 // pred_check
            _
          $region123: #{tpu_custom_call.1} parent=32 // pred_check_branch
            %283 = sbr.rel (0) target = $region125
          $region124: #{tpu_custom_call.1} parent=32 // pred_region
            %284 = vsyncadd [#allocation3], 16
          $region125: #{tpu_custom_call.1} parent=32 // pred_fallthru
            _
          %s285 = sadd.s32 %s139, 3
          %s286 = sld [smem:[#allocation5 + %s285]]
          %s287 = sadd.s32 %s133, 384
          %s288 = scalar_lea.vmem %s1, %s286
          %s289 = scalar_lea.vmem [#allocation2], %s287
          %p291 = scmp.lt.u32.totalorder 1, 8
          %p292 = pneg %p291
          // Predicated region
          $region126: #{tpu_custom_call.1} parent=32 // pred_check
            _
          $region127: #{tpu_custom_call.1} parent=32 // pred_check_branch
            %294 = sbr.rel (%p291) target = $region129
          $region128: #{tpu_custom_call.1} parent=32 // pred_region
            %s309 = sand.u32 1, 7
            %p310 = scmp.eq.s32.totalorder %s309, 0
            %p311 = pneg %p310
            // Predicated region
            $region141: #{tpu_custom_call.1} parent=128 // pred_check
              _
            $region142: #{tpu_custom_call.1} parent=128 // pred_check_branch
              %313 = sbr.rel (%p310) target = $region144
            $region143: #{tpu_custom_call.1} parent=128 // pred_region
              %s314 = sand.u32 1, 7
              %s315 = ssub.s32 1, %s314
              %s316 = scalar_lea.vmem %s288, %s315
              %s317 = ssub.s32 1, %s314
              %s318 = scalar_lea.vmem %s289, %s317 [#allocation2]
              %s319 = sshllo.u32 0, %s314
              loop: start=0, step=1, limit=1
              $region145: #{tpu_custom_call.1} parent=143 // loop_pre_header
                _
              $region146: #{tpu_custom_call.1} parent=143 // loop_header
                %s321 = sphi 0, %s325
                %p322 = scmp.ge.s32.totalorder %s321, 1
                %s326 = sphi %s316, %s316
                %s327 = sphi %s318, %s318
              $region147: #{tpu_custom_call.1} parent=143 // loop_header_branch
                %324 = sbr.rel (%p322) target = $region151
              $region148: #{tpu_custom_call.1} parent=143 // loop_body
                %v328 = vld [vmem:[%s326] sm:%s319]
                %329 = vst [vmem:[%s327] sm:%s319] %v328
              $region149: #{tpu_custom_call.1} parent=143 // loop_footer
                %s325 = sadd.s32 1, %s321
              $region150: #{tpu_custom_call.1} parent=143 // loop_footer_branch
                %320 = sbr.rel target = $region146
              $region151: #{tpu_custom_call.1} parent=143 // loop_exit
                _
            $region144: #{tpu_custom_call.1} parent=128 // pred_fallthru
              _
          $region129: #{tpu_custom_call.1} parent=32 // pred_fallthru
            _
          // Predicated region
          $region130: #{tpu_custom_call.1} parent=32 // pred_check
            %p295 = pneg %p291
          $region131: #{tpu_custom_call.1} parent=32 // pred_check_branch
            %297 = sbr.rel (%p295) target = $region133
          $region132: #{tpu_custom_call.1} parent=32 // pred_region
            %s298 = sshllo.u32 0, 1
            loop: start=0, step=1, limit=1
            $region134: #{tpu_custom_call.1} parent=132 // loop_pre_header
              _
            $region135: #{tpu_custom_call.1} parent=132 // loop_header
              %s300 = sphi 0, %s304
              %p301 = scmp.ge.s32.totalorder %s300, 1
              %s305 = sphi %s288, %s288
              %s306 = sphi %s289, %s289
            $region136: #{tpu_custom_call.1} parent=132 // loop_header_branch
              %303 = sbr.rel (%p301) target = $region140
            $region137: #{tpu_custom_call.1} parent=132 // loop_body
              %v307 = vld [vmem:[%s305] sm:%s298]
              %308 = vst [vmem:[%s306] sm:%s298] %v307
            $region138: #{tpu_custom_call.1} parent=132 // loop_footer
              %s304 = sadd.s32 1, %s300
            $region139: #{tpu_custom_call.1} parent=132 // loop_footer_branch
              %299 = sbr.rel target = $region135
            $region140: #{tpu_custom_call.1} parent=132 // loop_exit
              _
          $region133: #{tpu_custom_call.1} parent=32 // pred_fallthru
            _
          // Predicated region
          $region152: #{tpu_custom_call.1} parent=32 // pred_check
            _
          $region153: #{tpu_custom_call.1} parent=32 // pred_check_branch
            %332 = sbr.rel (0) target = $region155
          $region154: #{tpu_custom_call.1} parent=32 // pred_region
            %333 = vsyncadd [#allocation3], 16
          $region155: #{tpu_custom_call.1} parent=32 // pred_fallthru
            _
        $region33: #{tpu_custom_call.1} parent=27 // loop_footer
          %s137 = sadd.s32 1, %s133
        $region34: #{tpu_custom_call.1} parent=27 // loop_footer_branch
          %132 = sbr.rel target = $region30
        $region35: #{tpu_custom_call.1} parent=27 // loop_exit
          _
        loop: start=0, step=1, limit=128
        $region156: #{tpu_custom_call.1} parent=27 // loop_pre_header
          _
        $region157: #{tpu_custom_call.1} parent=27 // loop_header
          %s335 = sphi 0, %s339
          %p336 = scmp.ge.s32.totalorder %s335, 128
        $region158: #{tpu_custom_call.1} parent=27 // loop_header_branch
          %338 = sbr.rel (%p336) target = $region162
        $region159: #{tpu_custom_call.1} parent=27 // loop_body
          %s340 = smul.u32 1, 1
          %s341 = sshll.u32 %s340, 4
          %342 = dma.done [#allocation3], %s341
          %s343 = sshll.u32 %s340, 4
          %344 = dma.done [#allocation3], %s343
          %s345 = sshll.u32 %s340, 4
          %346 = dma.done [#allocation3], %s345
          %s347 = sshll.u32 %s340, 4
          %348 = dma.done [#allocation3], %s347
        $region160: #{tpu_custom_call.1} parent=27 // loop_footer
          %s339 = sadd.s32 1, %s335
        $region161: #{tpu_custom_call.1} parent=27 // loop_footer_branch
          %334 = sbr.rel target = $region157
        $region162: #{tpu_custom_call.1} parent=27 // loop_exit
          _
        %v349 = vld [vmem:[#allocation2] sm:$0xff]
        %v350 = vld [vmem:[#allocation2 + $0x8] sm:$0xff]
        %v351 = vld [vmem:[#allocation2 + $0x10] sm:$0xff]
        %v352 = vld [vmem:[#allocation2 + $0x18] sm:$0xff]
        %v353 = vld [vmem:[#allocation2 + $0x20] sm:$0xff]
        %v354 = vld [vmem:[#allocation2 + $0x28] sm:$0xff]
        %v355 = vld [vmem:[#allocation2 + $0x30] sm:$0xff]
        %v356 = vld [vmem:[#allocation2 + $0x38] sm:$0xff]
        %v357 = vld [vmem:[#allocation2 + $0x40] sm:$0xff]
        %v358 = vld [vmem:[#allocation2 + $0x48] sm:$0xff]
        %v359 = vld [vmem:[#allocation2 + $0x50] sm:$0xff]
        %v360 = vld [vmem:[#allocation2 + $0x58] sm:$0xff]
        %v361 = vld [vmem:[#allocation2 + $0x60] sm:$0xff]
        %v362 = vld [vmem:[#allocation2 + $0x68] sm:$0xff]
        %v363 = vld [vmem:[#allocation2 + $0x70] sm:$0xff]
        %v364 = vld [vmem:[#allocation2 + $0x78] sm:$0xff]
        %v365 = vld [vmem:[%s2] sm:$0xff]
        %v366 = vld [vmem:[%s2 + $0x8] sm:$0xff]
        %v367 = vld [vmem:[%s2 + $0x10] sm:$0xff]
        %v368 = vld [vmem:[%s2 + $0x18] sm:$0xff]
        %v369 = vld [vmem:[%s2 + $0x20] sm:$0xff]
        %v370 = vld [vmem:[%s2 + $0x28] sm:$0xff]
        %v371 = vld [vmem:[%s2 + $0x30] sm:$0xff]
        %v372 = vld [vmem:[%s2 + $0x38] sm:$0xff]
        %v373 = vld [vmem:[#allocation2 + $0x80] sm:$0xff]
        %v374 = vld [vmem:[#allocation2 + $0x88] sm:$0xff]
        %v375 = vld [vmem:[#allocation2 + $0x90] sm:$0xff]
        %v376 = vld [vmem:[#allocation2 + $0x98] sm:$0xff]
        %v377 = vld [vmem:[#allocation2 + $0xa0] sm:$0xff]
        %v378 = vld [vmem:[#allocation2 + $0xa8] sm:$0xff]
        %v379 = vld [vmem:[#allocation2 + $0xb0] sm:$0xff]
        %v380 = vld [vmem:[#allocation2 + $0xb8] sm:$0xff]
        %v381 = vld [vmem:[#allocation2 + $0xc0] sm:$0xff]
        %v382 = vld [vmem:[#allocation2 + $0xc8] sm:$0xff]
        %v383 = vld [vmem:[#allocation2 + $0xd0] sm:$0xff]
        %v384 = vld [vmem:[#allocation2 + $0xd8] sm:$0xff]
        %v385 = vld [vmem:[#allocation2 + $0xe0] sm:$0xff]
        %v386 = vld [vmem:[#allocation2 + $0xe8] sm:$0xff]
        %v387 = vld [vmem:[#allocation2 + $0xf0] sm:$0xff]
        %v388 = vld [vmem:[#allocation2 + $0xf8] sm:$0xff]
        %vm389 = vcmask 523264
        %v391 = vsel %vm389, %v373, 0
        %v394 = vsel %vm389, %v374, 0
        %v397 = vsel %vm389, %v375, 0
        %v400 = vsel %vm389, %v376, 0
        %v403 = vsel %vm389, %v377, 0
        %v406 = vsel %vm389, %v378, 0
        %v409 = vsel %vm389, %v379, 0
        %v412 = vsel %vm389, %v380, 0
        %v415 = vsel %vm389, %v381, 0
        %v418 = vsel %vm389, %v382, 0
        %v421 = vsel %vm389, %v383, 0
        %v424 = vsel %vm389, %v384, 0
        %v427 = vsel %vm389, %v385, 0
        %v430 = vsel %vm389, %v386, 0
        %v433 = vsel %vm389, %v387, 0
        %v436 = vsel %vm389, %v388, 0
        %438 = vmatprep.subr.mxu0 0.0
        %439 = vmatpush1.msra.mxu0 %v365
        %440 = vmatprep.subr.mxu0 0.0
        %441 = vmatpush1.msra.mxu0 %v366
        %442 = vmatprep.subr.mxu0 0.0
        %443 = vmatpush1.msra.mxu0 %v367
        %444 = vmatprep.subr.mxu0 0.0
        %445 = vmatpush1.msra.mxu0 %v368
        %446 = vmatprep.subr.mxu0 0.0
        %447 = vmatpush1.msra.mxu0 %v369
        %448 = vmatprep.subr.mxu0 0.0
        %449 = vmatpush1.msra.mxu0 %v370
        %450 = vmatprep.subr.mxu0 0.0
        %451 = vmatpush1.msra.mxu0 %v371
        %452 = vmatprep.subr.mxu0 0.0
        %453 = vmatpush1.msra.mxu0 %v372
        %454 = vmatprep.subr.mxu0 0.0
        %455 = vmatpush1.msra.mxu0 0.0
        %456 = vmatprep.subr.mxu0 0.0
        %457 = vmatpush1.msra.mxu0 0.0
        %458 = vmatprep.subr.mxu0 0.0
        %459 = vmatpush1.msra.mxu0 0.0
        %460 = vmatprep.subr.mxu0 0.0
        %461 = vmatpush1.msra.mxu0 0.0
        %462 = vmatprep.subr.mxu0 0.0
        %463 = vmatpush1.msra.mxu0 0.0
        %464 = vmatprep.subr.mxu0 0.0
        %465 = vmatpush1.msra.mxu0 0.0
        %466 = vmatprep.subr.mxu0 0.0
        %467 = vmatpush1.msra.mxu0 0.0
        %468 = vmatprep.subr.mxu0 0.0
        %469 = vmatpush1.msra.mxu0 0.0
        %470 = vmatprep.subr.mxu0 0.0
        %471 = vmatpush1.msra.mxu0 0.0
        %472 = vmatprep.subr.mxu0 0.0
        %473 = vmatpush1.msra.mxu0 0.0
        %474 = vmatprep.subr.mxu0 0.0
        %475 = vmatpush1.msra.mxu0 0.0
        %476 = vmatprep.subr.mxu0 0.0
        %477 = vmatpush1.msra.mxu0 0.0
        %478 = vmatprep.subr.mxu0 0.0
        %479 = vmatpush1.msra.mxu0 0.0
        %480 = vmatprep.subr.mxu0 0.0
        %481 = vmatpush1.msra.mxu0 0.0
        %482 = vmatprep.subr.mxu0 0.0
        %483 = vmatpush1.msra.mxu0 0.0
        %484 = vmatprep.subr.mxu0 0.0
        %485 = vmatpush1.msra.mxu0 0.0
        %486 = vmatprep.subr.mxu0 0.0
        %487 = vmatpush1.msra.mxu0 0.0
        %488 = vmatprep.subr.mxu0 0.0
        %489 = vmatpush1.msra.mxu0 0.0
        %490 = vmatprep.subr.mxu0 0.0
        %491 = vmatpush1.msra.mxu0 0.0
        %492 = vmatprep.subr.mxu0 0.0
        %493 = vmatpush1.msra.mxu0 0.0
        %494 = vmatprep.subr.mxu0 0.0
        %495 = vmatpush1.msra.mxu0 0.0
        %496 = vmatprep.subr.mxu0 0.0
        %497 = vmatpush1.msra.mxu0 0.0
        %498 = vmatprep.subr.mxu0 0.0
        %499 = vmatpush1.msra.mxu0 0.0
        %500 = vmatprep.subr.mxu0 0.0
        %501 = vmatpush1.msra.mxu0 0.0
        %502 = vmatprep.mubr.f32.mxu0 0.0
        %503 = vmatmul.mubr.f32.gmra.mrb[0].mxu0 %v391
        %v504 = vpop.f32.mrb[0].mxu0
        %v505 = vadd.f32 0.0, %v504
        %v506 = vpop.f32.mrb[0].mxu0
        %507 = vmatprep.mubr.f32.mxu0 0.0
        %508 = vmatmul.mubr.f32.gmra.mrb[0].mxu0 %v394
        %v509 = vpop.f32.mrb[0].mxu0
        %v510 = vadd.f32 0.0, %v509
        %v511 = vpop.f32.mrb[0].mxu0
        %512 = vmatprep.mubr.f32.mxu0 0.0
        %513 = vmatmul.mubr.f32.gmra.mrb[0].mxu0 %v397
        %v514 = vpop.f32.mrb[0].mxu0
        %v515 = vadd.f32 0.0, %v514
        %v516 = vpop.f32.mrb[0].mxu0
        %517 = vmatprep.mubr.f32.mxu0 0.0
        %518 = vmatmul.mubr.f32.gmra.mrb[0].mxu0 %v400
        %v519 = vpop.f32.mrb[0].mxu0
        %v520 = vadd.f32 0.0, %v519
        %v521 = vpop.f32.mrb[0].mxu0
        %522 = vmatprep.mubr.f32.mxu0 0.0
        %523 = vmatmul.mubr.f32.gmra.mrb[0].mxu0 %v403
        %v524 = vpop.f32.mrb[0].mxu0
        %v525 = vadd.f32 0.0, %v524
        %v526 = vpop.f32.mrb[0].mxu0
        %527 = vmatprep.mubr.f32.mxu0 0.0
        %528 = vmatmul.mubr.f32.gmra.mrb[0].mxu0 %v406
        %v529 = vpop.f32.mrb[0].mxu0
        %v530 = vadd.f32 0.0, %v529
        %v531 = vpop.f32.mrb[0].mxu0
        %532 = vmatprep.mubr.f32.mxu0 0.0
        %533 = vmatmul.mubr.f32.gmra.mrb[0].mxu0 %v409
        %v534 = vpop.f32.mrb[0].mxu0
        %v535 = vadd.f32 0.0, %v534
        %v536 = vpop.f32.mrb[0].mxu0
        %537 = vmatprep.mubr.f32.mxu0 0.0
        %538 = vmatmul.mubr.f32.gmra.mrb[0].mxu0 %v412
        %v539 = vpop.f32.mrb[0].mxu0
        %v540 = vadd.f32 0.0, %v539
        %v541 = vpop.f32.mrb[0].mxu0
        %542 = vmatprep.mubr.f32.mxu0 0.0
        %543 = vmatmul.mubr.f32.gmra.mrb[0].mxu0 %v415
        %v544 = vpop.f32.mrb[0].mxu0
        %v545 = vadd.f32 0.0, %v544
        %v546 = vpop.f32.mrb[0].mxu0
        %547 = vmatprep.mubr.f32.mxu0 0.0
        %548 = vmatmul.mubr.f32.gmra.mrb[0].mxu0 %v418
        %v549 = vpop.f32.mrb[0].mxu0
        %v550 = vadd.f32 0.0, %v549
        %v551 = vpop.f32.mrb[0].mxu0
        %552 = vmatprep.mubr.f32.mxu0 0.0
        %553 = vmatmul.mubr.f32.gmra.mrb[0].mxu0 %v421
        %v554 = vpop.f32.mrb[0].mxu0
        %v555 = vadd.f32 0.0, %v554
        %v556 = vpop.f32.mrb[0].mxu0
        %557 = vmatprep.mubr.f32.mxu0 0.0
        %558 = vmatmul.mubr.f32.gmra.mrb[0].mxu0 %v424
        %v559 = vpop.f32.mrb[0].mxu0
        %v560 = vadd.f32 0.0, %v559
        %v561 = vpop.f32.mrb[0].mxu0
        %562 = vmatprep.mubr.f32.mxu0 0.0
        %563 = vmatmul.mubr.f32.gmra.mrb[0].mxu0 %v427
        %v564 = vpop.f32.mrb[0].mxu0
        %v565 = vadd.f32 0.0, %v564
        %v566 = vpop.f32.mrb[0].mxu0
        %567 = vmatprep.mubr.f32.mxu0 0.0
        %568 = vmatmul.mubr.f32.gmra.mrb[0].mxu0 %v430
        %v569 = vpop.f32.mrb[0].mxu0
        %v570 = vadd.f32 0.0, %v569
        %v571 = vpop.f32.mrb[0].mxu0
        %572 = vmatprep.mubr.f32.mxu0 0.0
        %573 = vmatmul.mubr.f32.gmra.mrb[0].mxu0 %v433
        %v574 = vpop.f32.mrb[0].mxu0
        %v575 = vadd.f32 0.0, %v574
        %v576 = vpop.f32.mrb[0].mxu0
        %577 = vmatprep.mubr.f32.mxu0 0.0
        %578 = vmatmul.mubr.f32.gmra.mrb[0].mxu0 %v436
        %v579 = vpop.f32.mrb[0].mxu0
        %v580 = vadd.f32 0.0, %v579
        %v581 = vpop.f32.mrb[0].mxu0
        %582 = vdwg.mxu0
        %v584 = vsel %vm389, %v349, 0
        %v587 = vsel %vm389, %v350, 0
        %v590 = vsel %vm389, %v351, 0
        %v593 = vsel %vm389, %v352, 0
        %v596 = vsel %vm389, %v353, 0
        %v599 = vsel %vm389, %v354, 0
        %v602 = vsel %vm389, %v355, 0
        %v605 = vsel %vm389, %v356, 0
        %v608 = vsel %vm389, %v357, 0
        %v611 = vsel %vm389, %v358, 0
        %v614 = vsel %vm389, %v359, 0
        %v617 = vsel %vm389, %v360, 0
        %v620 = vsel %vm389, %v361, 0
        %v623 = vsel %vm389, %v362, 0
        %v626 = vsel %vm389, %v363, 0
        %v629 = vsel %vm389, %v364, 0
        %631 = vmatprep.subr.mxu0 0.0
        %632 = vmatpush1.msra.mxu0 %v365
        %633 = vmatprep.subr.mxu0 0.0
        %634 = vmatpush1.msra.mxu0 %v366
        %635 = vmatprep.subr.mxu0 0.0
        %636 = vmatpush1.msra.mxu0 %v367
        %637 = vmatprep.subr.mxu0 0.0
        %638 = vmatpush1.msra.mxu0 %v368
        %639 = vmatprep.subr.mxu0 0.0
        %640 = vmatpush1.msra.mxu0 %v369
        %641 = vmatprep.subr.mxu0 0.0
        %642 = vmatpush1.msra.mxu0 %v370
        %643 = vmatprep.subr.mxu0 0.0
        %644 = vmatpush1.msra.mxu0 %v371
        %645 = vmatprep.subr.mxu0 0.0
        %646 = vmatpush1.msra.mxu0 %v372
        %647 = vmatprep.subr.mxu0 0.0
        %648 = vmatpush1.msra.mxu0 0.0
        %649 = vmatprep.subr.mxu0 0.0
        %650 = vmatpush1.msra.mxu0 0.0
        %651 = vmatprep.subr.mxu0 0.0
        %652 = vmatpush1.msra.mxu0 0.0
        %653 = vmatprep.subr.mxu0 0.0
        %654 = vmatpush1.msra.mxu0 0.0
        %655 = vmatprep.subr.mxu0 0.0
        %656 = vmatpush1.msra.mxu0 0.0
        %657 = vmatprep.subr.mxu0 0.0
        %658 = vmatpush1.msra.mxu0 0.0
        %659 = vmatprep.subr.mxu0 0.0
        %660 = vmatpush1.msra.mxu0 0.0
        %661 = vmatprep.subr.mxu0 0.0
        %662 = vmatpush1.msra.mxu0 0.0
        %663 = vmatprep.subr.mxu0 0.0
        %664 = vmatpush1.msra.mxu0 0.0
        %665 = vmatprep.subr.mxu0 0.0
        %666 = vmatpush1.msra.mxu0 0.0
        %667 = vmatprep.subr.mxu0 0.0
        %668 = vmatpush1.msra.mxu0 0.0
        %669 = vmatprep.subr.mxu0 0.0
        %670 = vmatpush1.msra.mxu0 0.0
        %671 = vmatprep.subr.mxu0 0.0
        %672 = vmatpush1.msra.mxu0 0.0
        %673 = vmatprep.subr.mxu0 0.0
        %674 = vmatpush1.msra.mxu0 0.0
        %675 = vmatprep.subr.mxu0 0.0
        %676 = vmatpush1.msra.mxu0 0.0
        %677 = vmatprep.subr.mxu0 0.0
        %678 = vmatpush1.msra.mxu0 0.0
        %679 = vmatprep.subr.mxu0 0.0
        %680 = vmatpush1.msra.mxu0 0.0
        %681 = vmatprep.subr.mxu0 0.0
        %682 = vmatpush1.msra.mxu0 0.0
        %683 = vmatprep.subr.mxu0 0.0
        %684 = vmatpush1.msra.mxu0 0.0
        %685 = vmatprep.subr.mxu0 0.0
        %686 = vmatpush1.msra.mxu0 0.0
        %687 = vmatprep.subr.mxu0 0.0
        %688 = vmatpush1.msra.mxu0 0.0
        %689 = vmatprep.subr.mxu0 0.0
        %690 = vmatpush1.msra.mxu0 0.0
        %691 = vmatprep.subr.mxu0 0.0
        %692 = vmatpush1.msra.mxu0 0.0
        %693 = vmatprep.subr.mxu0 0.0
        %694 = vmatpush1.msra.mxu0 0.0
        %695 = vmatprep.mubr.f32.mxu0 0.0
        %696 = vmatmul.mubr.f32.gmra.mrb[0].mxu0 %v584
        %v697 = vpop.f32.mrb[0].mxu0
        %v698 = vadd.f32 %v505, %v697
        %v699 = vpop.f32.mrb[0].mxu0
        %700 = vmatprep.mubr.f32.mxu0 0.0
        %701 = vmatmul.mubr.f32.gmra.mrb[0].mxu0 %v587
        %v702 = vpop.f32.mrb[0].mxu0
        %v703 = vadd.f32 %v510, %v702
        %v704 = vpop.f32.mrb[0].mxu0
        %705 = vmatprep.mubr.f32.mxu0 0.0
        %706 = vmatmul.mubr.f32.gmra.mrb[0].mxu0 %v590
        %v707 = vpop.f32.mrb[0].mxu0
        %v708 = vadd.f32 %v515, %v707
        %v709 = vpop.f32.mrb[0].mxu0
        %710 = vmatprep.mubr.f32.mxu0 0.0
        %711 = vmatmul.mubr.f32.gmra.mrb[0].mxu0 %v593
        %v712 = vpop.f32.mrb[0].mxu0
        %v713 = vadd.f32 %v520, %v712
        %v714 = vpop.f32.mrb[0].mxu0
        %715 = vmatprep.mubr.f32.mxu0 0.0
        %716 = vmatmul.mubr.f32.gmra.mrb[0].mxu0 %v596
        %v717 = vpop.f32.mrb[0].mxu0
        %v718 = vadd.f32 %v525, %v717
        %v719 = vpop.f32.mrb[0].mxu0
        %720 = vmatprep.mubr.f32.mxu0 0.0
        %721 = vmatmul.mubr.f32.gmra.mrb[0].mxu0 %v599
        %v722 = vpop.f32.mrb[0].mxu0
        %v723 = vadd.f32 %v530, %v722
        %v724 = vpop.f32.mrb[0].mxu0
        %725 = vmatprep.mubr.f32.mxu0 0.0
        %726 = vmatmul.mubr.f32.gmra.mrb[0].mxu0 %v602
        %v727 = vpop.f32.mrb[0].mxu0
        %v728 = vadd.f32 %v535, %v727
        %v729 = vpop.f32.mrb[0].mxu0
        %730 = vmatprep.mubr.f32.mxu0 0.0
        %731 = vmatmul.mubr.f32.gmra.mrb[0].mxu0 %v605
        %v732 = vpop.f32.mrb[0].mxu0
        %v733 = vadd.f32 %v540, %v732
        %v734 = vpop.f32.mrb[0].mxu0
        %735 = vmatprep.mubr.f32.mxu0 0.0
        %736 = vmatmul.mubr.f32.gmra.mrb[0].mxu0 %v608
        %v737 = vpop.f32.mrb[0].mxu0
        %v738 = vadd.f32 %v545, %v737
        %v739 = vpop.f32.mrb[0].mxu0
        %740 = vmatprep.mubr.f32.mxu0 0.0
        %741 = vmatmul.mubr.f32.gmra.mrb[0].mxu0 %v611
        %v742 = vpop.f32.mrb[0].mxu0
        %v743 = vadd.f32 %v550, %v742
        %v744 = vpop.f32.mrb[0].mxu0
        %745 = vmatprep.mubr.f32.mxu0 0.0
        %746 = vmatmul.mubr.f32.gmra.mrb[0].mxu0 %v614
        %v747 = vpop.f32.mrb[0].mxu0
        %v748 = vadd.f32 %v555, %v747
        %v749 = vpop.f32.mrb[0].mxu0
        %750 = vmatprep.mubr.f32.mxu0 0.0
        %751 = vmatmul.mubr.f32.gmra.mrb[0].mxu0 %v617
        %v752 = vpop.f32.mrb[0].mxu0
        %v753 = vadd.f32 %v560, %v752
        %v754 = vpop.f32.mrb[0].mxu0
        %755 = vmatprep.mubr.f32.mxu0 0.0
        %756 = vmatmul.mubr.f32.gmra.mrb[0].mxu0 %v620
        %v757 = vpop.f32.mrb[0].mxu0
        %v758 = vadd.f32 %v565, %v757
        %v759 = vpop.f32.mrb[0].mxu0
        %760 = vmatprep.mubr.f32.mxu0 0.0
        %761 = vmatmul.mubr.f32.gmra.mrb[0].mxu0 %v623
        %v762 = vpop.f32.mrb[0].mxu0
        %v763 = vadd.f32 %v570, %v762
        %v764 = vpop.f32.mrb[0].mxu0
        %765 = vmatprep.mubr.f32.mxu0 0.0
        %766 = vmatmul.mubr.f32.gmra.mrb[0].mxu0 %v626
        %v767 = vpop.f32.mrb[0].mxu0
        %v768 = vadd.f32 %v575, %v767
        %v769 = vpop.f32.mrb[0].mxu0
        %770 = vmatprep.mubr.f32.mxu0 0.0
        %771 = vmatmul.mubr.f32.gmra.mrb[0].mxu0 %v629
        %v772 = vpop.f32.mrb[0].mxu0
        %v773 = vadd.f32 %v580, %v772
        %v774 = vpop.f32.mrb[0].mxu0
        %775 = vdwg.mxu0
        %v776 = vld [vmem:[#allocation2 + $0x100] sm:$0xff]
        %v777 = vld [vmem:[#allocation2 + $0x108] sm:$0xff]
        %v778 = vld [vmem:[#allocation2 + $0x110] sm:$0xff]
        %v779 = vld [vmem:[#allocation2 + $0x118] sm:$0xff]
        %v780 = vld [vmem:[#allocation2 + $0x120] sm:$0xff]
        %v781 = vld [vmem:[#allocation2 + $0x128] sm:$0xff]
        %v782 = vld [vmem:[#allocation2 + $0x130] sm:$0xff]
        %v783 = vld [vmem:[#allocation2 + $0x138] sm:$0xff]
        %v784 = vld [vmem:[#allocation2 + $0x140] sm:$0xff]
        %v785 = vld [vmem:[#allocation2 + $0x148] sm:$0xff]
        %v786 = vld [vmem:[#allocation2 + $0x150] sm:$0xff]
        %v787 = vld [vmem:[#allocation2 + $0x158] sm:$0xff]
        %v788 = vld [vmem:[#allocation2 + $0x160] sm:$0xff]
        %v789 = vld [vmem:[#allocation2 + $0x168] sm:$0xff]
        %v790 = vld [vmem:[#allocation2 + $0x170] sm:$0xff]
        %v791 = vld [vmem:[#allocation2 + $0x178] sm:$0xff]
        %v793 = vsel %vm389, %v776, 0
        %v796 = vsel %vm389, %v777, 0
        %v799 = vsel %vm389, %v778, 0
        %v802 = vsel %vm389, %v779, 0
        %v805 = vsel %vm389, %v780, 0
        %v808 = vsel %vm389, %v781, 0
        %v811 = vsel %vm389, %v782, 0
        %v814 = vsel %vm389, %v783, 0
        %v817 = vsel %vm389, %v784, 0
        %v820 = vsel %vm389, %v785, 0
        %v823 = vsel %vm389, %v786, 0
        %v826 = vsel %vm389, %v787, 0
        %v829 = vsel %vm389, %v788, 0
        %v832 = vsel %vm389, %v789, 0
        %v835 = vsel %vm389, %v790, 0
        %v838 = vsel %vm389, %v791, 0
        %840 = vmatprep.subr.mxu0 0.0
        %841 = vmatpush1.msra.mxu0 %v365
        %842 = vmatprep.subr.mxu0 0.0
        %843 = vmatpush1.msra.mxu0 %v366
        %844 = vmatprep.subr.mxu0 0.0
        %845 = vmatpush1.msra.mxu0 %v367
        %846 = vmatprep.subr.mxu0 0.0
        %847 = vmatpush1.msra.mxu0 %v368
        %848 = vmatprep.subr.mxu0 0.0
        %849 = vmatpush1.msra.mxu0 %v369
        %850 = vmatprep.subr.mxu0 0.0
        %851 = vmatpush1.msra.mxu0 %v370
        %852 = vmatprep.subr.mxu0 0.0
        %853 = vmatpush1.msra.mxu0 %v371
        %854 = vmatprep.subr.mxu0 0.0
        %855 = vmatpush1.msra.mxu0 %v372
        %856 = vmatprep.subr.mxu0 0.0
        %857 = vmatpush1.msra.mxu0 0.0
        %858 = vmatprep.subr.mxu0 0.0
        %859 = vmatpush1.msra.mxu0 0.0
        %860 = vmatprep.subr.mxu0 0.0
        %861 = vmatpush1.msra.mxu0 0.0
        %862 = vmatprep.subr.mxu0 0.0
        %863 = vmatpush1.msra.mxu0 0.0
        %864 = vmatprep.subr.mxu0 0.0
        %865 = vmatpush1.msra.mxu0 0.0
        %866 = vmatprep.subr.mxu0 0.0
        %867 = vmatpush1.msra.mxu0 0.0
        %868 = vmatprep.subr.mxu0 0.0
        %869 = vmatpush1.msra.mxu0 0.0
        %870 = vmatprep.subr.mxu0 0.0
        %871 = vmatpush1.msra.mxu0 0.0
        %872 = vmatprep.subr.mxu0 0.0
        %873 = vmatpush1.msra.mxu0 0.0
        %874 = vmatprep.subr.mxu0 0.0
        %875 = vmatpush1.msra.mxu0 0.0
        %876 = vmatprep.subr.mxu0 0.0
        %877 = vmatpush1.msra.mxu0 0.0
        %878 = vmatprep.subr.mxu0 0.0
        %879 = vmatpush1.msra.mxu0 0.0
        %880 = vmatprep.subr.mxu0 0.0
        %881 = vmatpush1.msra.mxu0 0.0
        %882 = vmatprep.subr.mxu0 0.0
        %883 = vmatpush1.msra.mxu0 0.0
        %884 = vmatprep.subr.mxu0 0.0
        %885 = vmatpush1.msra.mxu0 0.0
        %886 = vmatprep.subr.mxu0 0.0
        %887 = vmatpush1.msra.mxu0 0.0
        %888 = vmatprep.subr.mxu0 0.0
        %889 = vmatpush1.msra.mxu0 0.0
        %890 = vmatprep.subr.mxu0 0.0
        %891 = vmatpush1.msra.mxu0 0.0
        %892 = vmatprep.subr.mxu0 0.0
        %893 = vmatpush1.msra.mxu0 0.0
        %894 = vmatprep.subr.mxu0 0.0
        %895 = vmatpush1.msra.mxu0 0.0
        %896 = vmatprep.subr.mxu0 0.0
        %897 = vmatpush1.msra.mxu0 0.0
        %898 = vmatprep.subr.mxu0 0.0
        %899 = vmatpush1.msra.mxu0 0.0
        %900 = vmatprep.subr.mxu0 0.0
        %901 = vmatpush1.msra.mxu0 0.0
        %902 = vmatprep.subr.mxu0 0.0
        %903 = vmatpush1.msra.mxu0 0.0
        %904 = vmatprep.mubr.f32.mxu0 0.0
        %905 = vmatmul.mubr.f32.gmra.mrb[0].mxu0 %v793
        %v906 = vpop.f32.mrb[0].mxu0
        %v907 = vadd.f32 0.0, %v906
        %v908 = vpop.f32.mrb[0].mxu0
        %909 = vmatprep.mubr.f32.mxu0 0.0
        %910 = vmatmul.mubr.f32.gmra.mrb[0].mxu0 %v796
        %v911 = vpop.f32.mrb[0].mxu0
        %v912 = vadd.f32 0.0, %v911
        %v913 = vpop.f32.mrb[0].mxu0
        %914 = vmatprep.mubr.f32.mxu0 0.0
        %915 = vmatmul.mubr.f32.gmra.mrb[0].mxu0 %v799
        %v916 = vpop.f32.mrb[0].mxu0
        %v917 = vadd.f32 0.0, %v916
        %v918 = vpop.f32.mrb[0].mxu0
        %919 = vmatprep.mubr.f32.mxu0 0.0
        %920 = vmatmul.mubr.f32.gmra.mrb[0].mxu0 %v802
        %v921 = vpop.f32.mrb[0].mxu0
        %v922 = vadd.f32 0.0, %v921
        %v923 = vpop.f32.mrb[0].mxu0
        %924 = vmatprep.mubr.f32.mxu0 0.0
        %925 = vmatmul.mubr.f32.gmra.mrb[0].mxu0 %v805
        %v926 = vpop.f32.mrb[0].mxu0
        %v927 = vadd.f32 0.0, %v926
        %v928 = vpop.f32.mrb[0].mxu0
        %929 = vmatprep.mubr.f32.mxu0 0.0
        %930 = vmatmul.mubr.f32.gmra.mrb[0].mxu0 %v808
        %v931 = vpop.f32.mrb[0].mxu0
        %v932 = vadd.f32 0.0, %v931
        %v933 = vpop.f32.mrb[0].mxu0
        %934 = vmatprep.mubr.f32.mxu0 0.0
        %935 = vmatmul.mubr.f32.gmra.mrb[0].mxu0 %v811
        %v936 = vpop.f32.mrb[0].mxu0
        %v937 = vadd.f32 0.0, %v936
        %v938 = vpop.f32.mrb[0].mxu0
        %939 = vmatprep.mubr.f32.mxu0 0.0
        %940 = vmatmul.mubr.f32.gmra.mrb[0].mxu0 %v814
        %v941 = vpop.f32.mrb[0].mxu0
        %v942 = vadd.f32 0.0, %v941
        %v943 = vpop.f32.mrb[0].mxu0
        %944 = vmatprep.mubr.f32.mxu0 0.0
        %945 = vmatmul.mubr.f32.gmra.mrb[0].mxu0 %v817
        %v946 = vpop.f32.mrb[0].mxu0
        %v947 = vadd.f32 0.0, %v946
        %v948 = vpop.f32.mrb[0].mxu0
        %949 = vmatprep.mubr.f32.mxu0 0.0
        %950 = vmatmul.mubr.f32.gmra.mrb[0].mxu0 %v820
        %v951 = vpop.f32.mrb[0].mxu0
        %v952 = vadd.f32 0.0, %v951
        %v953 = vpop.f32.mrb[0].mxu0
        %954 = vmatprep.mubr.f32.mxu0 0.0
        %955 = vmatmul.mubr.f32.gmra.mrb[0].mxu0 %v823
        %v956 = vpop.f32.mrb[0].mxu0
        %v957 = vadd.f32 0.0, %v956
        %v958 = vpop.f32.mrb[0].mxu0
        %959 = vmatprep.mubr.f32.mxu0 0.0
        %960 = vmatmul.mubr.f32.gmra.mrb[0].mxu0 %v826
        %v961 = vpop.f32.mrb[0].mxu0
        %v962 = vadd.f32 0.0, %v961
        %v963 = vpop.f32.mrb[0].mxu0
        %964 = vmatprep.mubr.f32.mxu0 0.0
        %965 = vmatmul.mubr.f32.gmra.mrb[0].mxu0 %v829
        %v966 = vpop.f32.mrb[0].mxu0
        %v967 = vadd.f32 0.0, %v966
        %v968 = vpop.f32.mrb[0].mxu0
        %969 = vmatprep.mubr.f32.mxu0 0.0
        %970 = vmatmul.mubr.f32.gmra.mrb[0].mxu0 %v832
        %v971 = vpop.f32.mrb[0].mxu0
        %v972 = vadd.f32 0.0, %v971
        %v973 = vpop.f32.mrb[0].mxu0
        %974 = vmatprep.mubr.f32.mxu0 0.0
        %975 = vmatmul.mubr.f32.gmra.mrb[0].mxu0 %v835
        %v976 = vpop.f32.mrb[0].mxu0
        %v977 = vadd.f32 0.0, %v976
        %v978 = vpop.f32.mrb[0].mxu0
        %979 = vmatprep.mubr.f32.mxu0 0.0
        %980 = vmatmul.mubr.f32.gmra.mrb[0].mxu0 %v838
        %v981 = vpop.f32.mrb[0].mxu0
        %v982 = vadd.f32 0.0, %v981
        %v983 = vpop.f32.mrb[0].mxu0
        %984 = vdwg.mxu0
        %v985 = vadd.f32 %v698, %v907
        %v986 = vadd.f32 %v703, %v912
        %v987 = vadd.f32 %v708, %v917
        %v988 = vadd.f32 %v713, %v922
        %v989 = vadd.f32 %v718, %v927
        %v990 = vadd.f32 %v723, %v932
        %v991 = vadd.f32 %v728, %v937
        %v992 = vadd.f32 %v733, %v942
        %v993 = vadd.f32 %v738, %v947
        %v994 = vadd.f32 %v743, %v952
        %v995 = vadd.f32 %v748, %v957
        %v996 = vadd.f32 %v753, %v962
        %v997 = vadd.f32 %v758, %v967
        %v998 = vadd.f32 %v763, %v972
        %v999 = vadd.f32 %v768, %v977
        %v1000 = vadd.f32 %v773, %v982
        %v1001 = vld [vmem:[#allocation2 + $0x180] sm:$0xff]
        %v1002 = vld [vmem:[#allocation2 + $0x188] sm:$0xff]
        %v1003 = vld [vmem:[#allocation2 + $0x190] sm:$0xff]
        %v1004 = vld [vmem:[#allocation2 + $0x198] sm:$0xff]
        %v1005 = vld [vmem:[#allocation2 + $0x1a0] sm:$0xff]
        %v1006 = vld [vmem:[#allocation2 + $0x1a8] sm:$0xff]
        %v1007 = vld [vmem:[#allocation2 + $0x1b0] sm:$0xff]
        %v1008 = vld [vmem:[#allocation2 + $0x1b8] sm:$0xff]
        %v1009 = vld [vmem:[#allocation2 + $0x1c0] sm:$0xff]
        %v1010 = vld [vmem:[#allocation2 + $0x1c8] sm:$0xff]
        %v1011 = vld [vmem:[#allocation2 + $0x1d0] sm:$0xff]
        %v1012 = vld [vmem:[#allocation2 + $0x1d8] sm:$0xff]
        %v1013 = vld [vmem:[#allocation2 + $0x1e0] sm:$0xff]
        %v1014 = vld [vmem:[#allocation2 + $0x1e8] sm:$0xff]
        %v1015 = vld [vmem:[#allocation2 + $0x1f0] sm:$0xff]
        %v1016 = vld [vmem:[#allocation2 + $0x1f8] sm:$0xff]
        %v1018 = vsel %vm389, %v1001, 0
        %v1021 = vsel %vm389, %v1002, 0
        %v1024 = vsel %vm389, %v1003, 0
        %v1027 = vsel %vm389, %v1004, 0
        %v1030 = vsel %vm389, %v1005, 0
        %v1033 = vsel %vm389, %v1006, 0
        %v1036 = vsel %vm389, %v1007, 0
        %v1039 = vsel %vm389, %v1008, 0
        %v1042 = vsel %vm389, %v1009, 0
        %v1045 = vsel %vm389, %v1010, 0
        %v1048 = vsel %vm389, %v1011, 0
        %v1051 = vsel %vm389, %v1012, 0
        %v1054 = vsel %vm389, %v1013, 0
        %v1057 = vsel %vm389, %v1014, 0
        %v1060 = vsel %vm389, %v1015, 0
        %v1063 = vsel %vm389, %v1016, 0
        %1065 = vmatprep.subr.mxu0 0.0
        %1066 = vmatpush1.msra.mxu0 %v365
        %1067 = vmatprep.subr.mxu0 0.0
        %1068 = vmatpush1.msra.mxu0 %v366
        %1069 = vmatprep.subr.mxu0 0.0
        %1070 = vmatpush1.msra.mxu0 %v367
        %1071 = vmatprep.subr.mxu0 0.0
        %1072 = vmatpush1.msra.mxu0 %v368
        %1073 = vmatprep.subr.mxu0 0.0
        %1074 = vmatpush1.msra.mxu0 %v369
        %1075 = vmatprep.subr.mxu0 0.0
        %1076 = vmatpush1.msra.mxu0 %v370
        %1077 = vmatprep.subr.mxu0 0.0
        %1078 = vmatpush1.msra.mxu0 %v371
        %1079 = vmatprep.subr.mxu0 0.0
        %1080 = vmatpush1.msra.mxu0 %v372
        %1081 = vmatprep.subr.mxu0 0.0
        %1082 = vmatpush1.msra.mxu0 0.0
        %1083 = vmatprep.subr.mxu0 0.0
        %1084 = vmatpush1.msra.mxu0 0.0
        %1085 = vmatprep.subr.mxu0 0.0
        %1086 = vmatpush1.msra.mxu0 0.0
        %1087 = vmatprep.subr.mxu0 0.0
        %1088 = vmatpush1.msra.mxu0 0.0
        %1089 = vmatprep.subr.mxu0 0.0
        %1090 = vmatpush1.msra.mxu0 0.0
        %1091 = vmatprep.subr.mxu0 0.0
        %1092 = vmatpush1.msra.mxu0 0.0
        %1093 = vmatprep.subr.mxu0 0.0
        %1094 = vmatpush1.msra.mxu0 0.0
        %1095 = vmatprep.subr.mxu0 0.0
        %1096 = vmatpush1.msra.mxu0 0.0
        %1097 = vmatprep.subr.mxu0 0.0
        %1098 = vmatpush1.msra.mxu0 0.0
        %1099 = vmatprep.subr.mxu0 0.0
        %1100 = vmatpush1.msra.mxu0 0.0
        %1101 = vmatprep.subr.mxu0 0.0
        %1102 = vmatpush1.msra.mxu0 0.0
        %1103 = vmatprep.subr.mxu0 0.0
        %1104 = vmatpush1.msra.mxu0 0.0
        %1105 = vmatprep.subr.mxu0 0.0
        %1106 = vmatpush1.msra.mxu0 0.0
        %1107 = vmatprep.subr.mxu0 0.0
        %1108 = vmatpush1.msra.mxu0 0.0
        %1109 = vmatprep.subr.mxu0 0.0
        %1110 = vmatpush1.msra.mxu0 0.0
        %1111 = vmatprep.subr.mxu0 0.0
        %1112 = vmatpush1.msra.mxu0 0.0
        %1113 = vmatprep.subr.mxu0 0.0
        %1114 = vmatpush1.msra.mxu0 0.0
        %1115 = vmatprep.subr.mxu0 0.0
        %1116 = vmatpush1.msra.mxu0 0.0
        %1117 = vmatprep.subr.mxu0 0.0
        %1118 = vmatpush1.msra.mxu0 0.0
        %1119 = vmatprep.subr.mxu0 0.0
        %1120 = vmatpush1.msra.mxu0 0.0
        %1121 = vmatprep.subr.mxu0 0.0
        %1122 = vmatpush1.msra.mxu0 0.0
        %1123 = vmatprep.subr.mxu0 0.0
        %1124 = vmatpush1.msra.mxu0 0.0
        %1125 = vmatprep.subr.mxu0 0.0
        %1126 = vmatpush1.msra.mxu0 0.0
        %1127 = vmatprep.subr.mxu0 0.0
        %1128 = vmatpush1.msra.mxu0 0.0
        %1129 = vmatprep.mubr.f32.mxu0 0.0
        %1130 = vmatmul.mubr.f32.gmra.mrb[0].mxu0 %v1018
        %v1131 = vpop.f32.mrb[0].mxu0
        %v1132 = vadd.f32 0.0, %v1131
        %v1133 = vpop.f32.mrb[0].mxu0
        %1134 = vmatprep.mubr.f32.mxu0 0.0
        %1135 = vmatmul.mubr.f32.gmra.mrb[0].mxu0 %v1021
        %v1136 = vpop.f32.mrb[0].mxu0
        %v1137 = vadd.f32 0.0, %v1136
        %v1138 = vpop.f32.mrb[0].mxu0
        %1139 = vmatprep.mubr.f32.mxu0 0.0
        %1140 = vmatmul.mubr.f32.gmra.mrb[0].mxu0 %v1024
        %v1141 = vpop.f32.mrb[0].mxu0
        %v1142 = vadd.f32 0.0, %v1141
        %v1143 = vpop.f32.mrb[0].mxu0
        %1144 = vmatprep.mubr.f32.mxu0 0.0
        %1145 = vmatmul.mubr.f32.gmra.mrb[0].mxu0 %v1027
        %v1146 = vpop.f32.mrb[0].mxu0
        %v1147 = vadd.f32 0.0, %v1146
        %v1148 = vpop.f32.mrb[0].mxu0
        %1149 = vmatprep.mubr.f32.mxu0 0.0
        %1150 = vmatmul.mubr.f32.gmra.mrb[0].mxu0 %v1030
        %v1151 = vpop.f32.mrb[0].mxu0
        %v1152 = vadd.f32 0.0, %v1151
        %v1153 = vpop.f32.mrb[0].mxu0
        %1154 = vmatprep.mubr.f32.mxu0 0.0
        %1155 = vmatmul.mubr.f32.gmra.mrb[0].mxu0 %v1033
        %v1156 = vpop.f32.mrb[0].mxu0
        %v1157 = vadd.f32 0.0, %v1156
        %v1158 = vpop.f32.mrb[0].mxu0
        %1159 = vmatprep.mubr.f32.mxu0 0.0
        %1160 = vmatmul.mubr.f32.gmra.mrb[0].mxu0 %v1036
        %v1161 = vpop.f32.mrb[0].mxu0
        %v1162 = vadd.f32 0.0, %v1161
        %v1163 = vpop.f32.mrb[0].mxu0
        %1164 = vmatprep.mubr.f32.mxu0 0.0
        %1165 = vmatmul.mubr.f32.gmra.mrb[0].mxu0 %v1039
        %v1166 = vpop.f32.mrb[0].mxu0
        %v1167 = vadd.f32 0.0, %v1166
        %v1168 = vpop.f32.mrb[0].mxu0
        %1169 = vmatprep.mubr.f32.mxu0 0.0
        %1170 = vmatmul.mubr.f32.gmra.mrb[0].mxu0 %v1042
        %v1171 = vpop.f32.mrb[0].mxu0
        %v1172 = vadd.f32 0.0, %v1171
        %v1173 = vpop.f32.mrb[0].mxu0
        %1174 = vmatprep.mubr.f32.mxu0 0.0
        %1175 = vmatmul.mubr.f32.gmra.mrb[0].mxu0 %v1045
        %v1176 = vpop.f32.mrb[0].mxu0
        %v1177 = vadd.f32 0.0, %v1176
        %v1178 = vpop.f32.mrb[0].mxu0
        %1179 = vmatprep.mubr.f32.mxu0 0.0
        %1180 = vmatmul.mubr.f32.gmra.mrb[0].mxu0 %v1048
        %v1181 = vpop.f32.mrb[0].mxu0
        %v1182 = vadd.f32 0.0, %v1181
        %v1183 = vpop.f32.mrb[0].mxu0
        %1184 = vmatprep.mubr.f32.mxu0 0.0
        %1185 = vmatmul.mubr.f32.gmra.mrb[0].mxu0 %v1051
        %v1186 = vpop.f32.mrb[0].mxu0
        %v1187 = vadd.f32 0.0, %v1186
        %v1188 = vpop.f32.mrb[0].mxu0
        %1189 = vmatprep.mubr.f32.mxu0 0.0
        %1190 = vmatmul.mubr.f32.gmra.mrb[0].mxu0 %v1054
        %v1191 = vpop.f32.mrb[0].mxu0
        %v1192 = vadd.f32 0.0, %v1191
        %v1193 = vpop.f32.mrb[0].mxu0
        %1194 = vmatprep.mubr.f32.mxu0 0.0
        %1195 = vmatmul.mubr.f32.gmra.mrb[0].mxu0 %v1057
        %v1196 = vpop.f32.mrb[0].mxu0
        %v1197 = vadd.f32 0.0, %v1196
        %v1198 = vpop.f32.mrb[0].mxu0
        %1199 = vmatprep.mubr.f32.mxu0 0.0
        %1200 = vmatmul.mubr.f32.gmra.mrb[0].mxu0 %v1060
        %v1201 = vpop.f32.mrb[0].mxu0
        %v1202 = vadd.f32 0.0, %v1201
        %v1203 = vpop.f32.mrb[0].mxu0
        %1204 = vmatprep.mubr.f32.mxu0 0.0
        %1205 = vmatmul.mubr.f32.gmra.mrb[0].mxu0 %v1063
        %v1206 = vpop.f32.mrb[0].mxu0
        %v1207 = vadd.f32 0.0, %v1206
        %v1208 = vpop.f32.mrb[0].mxu0
        %1209 = vdwg.mxu0
        %v1210 = vadd.f32 %v985, %v1132
        %v1211 = vadd.f32 %v986, %v1137
        %v1212 = vadd.f32 %v987, %v1142
        %v1213 = vadd.f32 %v988, %v1147
        %v1214 = vadd.f32 %v989, %v1152
        %v1215 = vadd.f32 %v990, %v1157
        %v1216 = vadd.f32 %v991, %v1162
        %v1217 = vadd.f32 %v992, %v1167
        %v1218 = vadd.f32 %v993, %v1172
        %v1219 = vadd.f32 %v994, %v1177
        %v1220 = vadd.f32 %v995, %v1182
        %v1221 = vadd.f32 %v996, %v1187
        %v1222 = vadd.f32 %v997, %v1192
        %v1223 = vadd.f32 %v998, %v1197
        %v1224 = vadd.f32 %v999, %v1202
        %v1225 = vadd.f32 %v1000, %v1207
        %v1226 = vld [vmem:[%s3] sm:$0x1]
        %v1228 = vlaneseq
        %v1229 = vshrl.u32 %v1228, 7
        %v1230 = vsub.s32 0, %v1229
        %v1231 = vrot.slane %v1226, %v1230
        %v1233 = vadd.f32 %v1210, %v1231
        %v1234 = vadd.f32 %v1211, %v1231
        %v1235 = vadd.f32 %v1212, %v1231
        %v1236 = vadd.f32 %v1213, %v1231
        %v1237 = vadd.f32 %v1214, %v1231
        %v1238 = vadd.f32 %v1215, %v1231
        %v1239 = vadd.f32 %v1216, %v1231
        %v1240 = vadd.f32 %v1217, %v1231
        %v1241 = vadd.f32 %v1218, %v1231
        %v1242 = vadd.f32 %v1219, %v1231
        %v1243 = vadd.f32 %v1220, %v1231
        %v1244 = vadd.f32 %v1221, %v1231
        %v1245 = vadd.f32 %v1222, %v1231
        %v1246 = vadd.f32 %v1223, %v1231
        %v1247 = vadd.f32 %v1224, %v1231
        %v1248 = vadd.f32 %v1225, %v1231
        %v1249 = vmax.f32 %v1233, 0.0
        %v1250 = vmax.f32 %v1234, 0.0
        %v1251 = vmax.f32 %v1235, 0.0
        %v1252 = vmax.f32 %v1236, 0.0
        %v1253 = vmax.f32 %v1237, 0.0
        %v1254 = vmax.f32 %v1238, 0.0
        %v1255 = vmax.f32 %v1239, 0.0
        %v1256 = vmax.f32 %v1240, 0.0
        %v1257 = vmax.f32 %v1241, 0.0
        %v1258 = vmax.f32 %v1242, 0.0
        %v1259 = vmax.f32 %v1243, 0.0
        %v1260 = vmax.f32 %v1244, 0.0
        %v1261 = vmax.f32 %v1245, 0.0
        %v1262 = vmax.f32 %v1246, 0.0
        %v1263 = vmax.f32 %v1247, 0.0
        %v1264 = vmax.f32 %v1248, 0.0
        %1265 = vst [vmem:[%s129] sm:$0xff] %v1249
        %1266 = vst [vmem:[%s129 + $0x8] sm:$0xff] %v1250
        %1267 = vst [vmem:[%s129 + $0x10] sm:$0xff] %v1251
        %1268 = vst [vmem:[%s129 + $0x18] sm:$0xff] %v1252
        %1269 = vst [vmem:[%s129 + $0x20] sm:$0xff] %v1253
        %1270 = vst [vmem:[%s129 + $0x28] sm:$0xff] %v1254
        %1271 = vst [vmem:[%s129 + $0x30] sm:$0xff] %v1255
        %1272 = vst [vmem:[%s129 + $0x38] sm:$0xff] %v1256
        %1273 = vst [vmem:[%s129 + $0x40] sm:$0xff] %v1257
        %1274 = vst [vmem:[%s129 + $0x48] sm:$0xff] %v1258
        %1275 = vst [vmem:[%s129 + $0x50] sm:$0xff] %v1259
        %1276 = vst [vmem:[%s129 + $0x58] sm:$0xff] %v1260
        %1277 = vst [vmem:[%s129 + $0x60] sm:$0xff] %v1261
        %1278 = vst [vmem:[%s129 + $0x68] sm:$0xff] %v1262
        %1279 = vst [vmem:[%s129 + $0x70] sm:$0xff] %v1263
        %1280 = vst [vmem:[%s129 + $0x78] sm:$0xff] %v1264
        %s1281 = sand.u32 %s74, 1
        %s1282 = scalar_lea.sflag [#allocation7], %s1281
        %s1283 = sand.u32 %s74, 1
        %s1284 = smul.addr %s1283, 128
        %s1285 = scalar_lea.vmem [#allocation6], %s1284
        // Predicated region
        $region163: #{tpu_custom_call.1} parent=27 // pred_check
          %p1286 = pneg %p84
        $region164: #{tpu_custom_call.1} parent=27 // pred_check_branch
          %1288 = sbr.rel (%p1286) target = $region166
        $region165: #{tpu_custom_call.1} parent=27 // pred_region
          %s1289 = smul.u32 16, %s24
          %s1291 = ssub.s32 2048, 2048
          %1292 = vsyncadd %s1282, %s1291
          %s1293 = smul.addr %s1289, 128
          %s1294 = scalar_lea.hbm %s4, %s1293
          %s1295 = sshll.u32 %s1285, 4
          %s1296 = int_to_ptr.vmem [resolvable:$true] %s1295
          %1301 = dma.vmem_to_hbm [thread:$0]  %s1296, 2048, %s1294, %s1282, 128, 128, 8
        $region166: #{tpu_custom_call.1} parent=27 // pred_fallthru
          _
      $region28: #{tpu_custom_call.1} parent=5 // pred_fallthru
        _
      %p1302 = scmp.le.s32.totalorder 2, %s19
      // Predicated region
      $region167: #{tpu_custom_call.1} parent=5 // pred_check
        %p1303 = pneg %p1302
      $region168: #{tpu_custom_call.1} parent=5 // pred_check_branch
        %1305 = sbr.rel (%p1303) target = $region170
      $region169: #{tpu_custom_call.1} parent=5 // pred_region
        %s1306 = ssub.s32 %s19, 2
        // Predicated region
        $region171: #{tpu_custom_call.1} parent=169 // pred_check
          %p1307 = pneg %p90
        $region172: #{tpu_custom_call.1} parent=169 // pred_check_branch
          %1309 = sbr.rel (%p1307) target = $region174
        $region173: #{tpu_custom_call.1} parent=169 // pred_region
          %s1310 = sand.u32 %s75, 1
          %s1311 = scalar_lea.sflag [#allocation7], %s1310
          %s1312 = sand.u32 %s75, 1
          %s1313 = smul.addr %s1312, 128
          %s1314 = scalar_lea.vmem [#allocation6], %s1313
          %1315 = dma.done %s1311, 2048
        $region174: #{tpu_custom_call.1} parent=169 // pred_fallthru
          _
      $region170: #{tpu_custom_call.1} parent=5 // pred_fallthru
        _
    $region6: #{tpu_custom_call.1} parent=1 // loop_footer
      %s23 = sadd.s32 1, %s19
    $region7: #{tpu_custom_call.1} parent=1 // loop_footer_branch
      %18 = sbr.rel target = $region3
    $region8: #{tpu_custom_call.1} parent=1 // loop_exit
      _
    %1316 = vsyncpa [#allocation7], 1
    %s1317 = scalar_lea.sflag [#allocation7], 1
    %1318 = vsyncpa %s1317, 1
  %1319 = vsyncmov [#allocation3]
  %s1320 = vpop.sfrf %1319
  %p1321 = scmp.eq.s32.totalorder %s1320, 0
  %p1322 = pneg %p1321
  %1324 = shalt.err (%p1322)

</llo_original>
